<compile_context>
chip_gen: v7x
topology: tpu7x:2x2x1
jax: 0.10.0
libtpu: 0.0.40
codegen_flags: <defaults>
</compile_context>

<pallas_src>
import functools

import jax
import jax.numpy as jnp
from jax.experimental import pallas as pl
from jax.experimental.pallas import tpu as pltpu


def _encoder_kernel(x_ref, wx_ref, wh_ref, b_ref, out_ref, gx_ref, *, T, M, TB):
    """One batch tile of the DA-RNN input-attention encoder (batch-as-lanes).

    x_ref  : (1, N, T*TB)  driving series; column index = t*TB + b_within_tile
    wx_ref : (4M, N)       (Wih * 1/N), rows reordered to [i, f, o, g]
    wh_ref : (4M, M)       Whh, rows reordered to [i, f, o, g]
    b_ref  : (4M, 1)       bih + bhh, reordered
    out_ref: (1, T, M, TB) encoder hidden states h_t (lane-dense slabs)
    gx_ref : (4M, T*TB)    VMEM scratch holding the hoisted input projection
    """
    # ---- hoisted input projection: ONE MXU matmul for all T steps ---------
    # gates_x[:, t*TB:(t+1)*TB] = (Wih/N) @ x_t^T + (bih + bhh)
    gx_ref[...] = (
        jnp.dot(wx_ref[...], x_ref[0], preferred_element_type=jnp.float32)
        + b_ref[...]                                   # lane-broadcast bias
    )

    wh = wh_ref[...]
    h = jnp.zeros((M, TB), jnp.float32)
    s = jnp.zeros((M, TB), jnp.float32)

    # T is small & static in DA-RNN -> fully unrolled recurrence.
    # TODO(synk): for T beyond ~32 switch to lax.fori_loop(..., unroll=8)
    # carrying (h, s) and a pl.ds(t*TB, TB) slice to bound vreg live ranges.
    for t in range(T):
        gates = gx_ref[:, t * TB:(t + 1) * TB] + jnp.dot(
            wh, h.astype(wh.dtype), preferred_element_type=jnp.float32)
        act_s = jax.nn.sigmoid(gates[:3 * M, :])       # [i; f; o] in one slice
        g = jnp.tanh(gates[3 * M:, :])                 # g in one slice
        s = act_s[M:2 * M] * s + act_s[:M] * g
        h = act_s[2 * M:3 * M] * jnp.tanh(s)
        out_ref[0, t] = h                              # lane-dense (M, TB) write


def _choose_batch_tile(B, max_tile=256):
    """Pick the batch tile (lane width inside the kernel).

    - Small batches: one tile (TB = B); splitting tiny batches only shrinks
      the lane dimension and adds grid-step overhead.
    - Large batches: prefer 256/128 (unmasked lanes, MXU-wide) which also
      gives nbt >= 2 "parallel" grid steps for v7x's two TensorCores.
    """
    if B <= max_tile:
        return B
    for tb in (256, 128):
        if tb <= max_tile and B % tb == 0:
            return tb
    for tb in range(max_tile, 0, -1):
        if B % tb == 0:
            return tb
    return B


def input_attention_encoder(inputs, params, *, batch_tile=None,
                            use_bf16_weights=False):
    """inputs: (B, T, N) float32, PyTorch convention. Returns (B, T, M)."""
    B, T, N = inputs.shape
    Wih = params["Wih"]                                # (4M, N), rows [i,f,g,o]
    Whh = params["Whh"]                                # (4M, M)
    M = Whh.shape[1]

    TB = _choose_batch_tile(B) if batch_tile is None else batch_tile
    assert B % TB == 0, "batch must be divisible by the batch tile"
    nbt = B // TB

    def reorder(w):                                    # [i,f,g,o] -> [i,f,o,g]
        return jnp.concatenate([w[:2 * M], w[3 * M:], w[2 * M:3 * M]], axis=0)

    # Attention softmax over a row-constant score is exactly 1/N; fold it into
    # the input-projection weight (for N a power of two this is bit-exact).
    Wx = reorder(Wih) * (1.0 / N)                      # (4M, N)
    Wh = reorder(Whh)                                  # (4M, M)
    b = reorder((params["bih"] + params["bhh"]).reshape(4 * M, 1))  # (4M, 1)

    x_dtype = jnp.bfloat16 if use_bf16_weights else jnp.float32
    if use_bf16_weights:                               # v6e/v7x native MXU path
        Wx = Wx.astype(jnp.bfloat16)
        Wh = Wh.astype(jnp.bfloat16)

    # (B, T, N) -> (nbt, N, T*TB): batch-as-lanes, columns ordered (t, b).
    x_k = (inputs.reshape(nbt, TB, T, N)
                 .transpose(0, 3, 2, 1)
                 .reshape(nbt, N, T * TB)
                 .astype(x_dtype))

    kernel = functools.partial(_encoder_kernel, T=T, M=M, TB=TB)

    out = pl.pallas_call(
        kernel,
        out_shape=jax.ShapeDtypeStruct((nbt, T, M, TB), jnp.float32),
        grid=(nbt,),
        in_specs=[
            pl.BlockSpec((1, N, T * TB), lambda bi: (bi, 0, 0)),
            pl.BlockSpec((4 * M, N), lambda bi: (0, 0)),
            pl.BlockSpec((4 * M, M), lambda bi: (0, 0)),
            pl.BlockSpec((4 * M, 1), lambda bi: (0, 0)),
        ],
        out_specs=pl.BlockSpec((1, T, M, TB), lambda bi: (bi, 0, 0, 0)),
        scratch_shapes=[pltpu.VMEM((4 * M, T * TB), jnp.float32)],
        compiler_params=pltpu.CompilerParams(
            dimension_semantics=("parallel",)),        # batch tiles independent
    )(x_k, Wx, Wh, b)

    # (nbt, T, M, TB) -> (B, T, M)
    return out.transpose(0, 3, 1, 2).reshape(B, T, M)


def reference_forward(inputs, params):
    """Pure-JAX mirror of the literal PyTorch forward (for verification)."""
    B, T, N = inputs.shape
    We_w, We_b = params["We_w"], params["We_b"]
    Ue_w = params["Ue_w"]
    Wih, Whh, bih, bhh = params["Wih"], params["Whh"], params["bih"], params["bhh"]
    M = Whh.shape[1]

    h = jnp.zeros((B, M), jnp.float32)
    c = jnp.zeros((B, M), jnp.float32)
    outs = []
    inputs_perm = jnp.transpose(inputs, (0, 2, 1))          # (B, N, T)
    for t in range(T):
        hc = jnp.concatenate([h, c], axis=1)                # (B, 2M)
        w = hc @ We_w.T + We_b                              # (B, T)
        x = jnp.repeat(w[:, None, :], N, axis=1)            # (B, N, T)
        y = jnp.einsum('bnt,st->bns', inputs_perm, Ue_w)    # (B, N, T)
        e = jnp.sum(jnp.einsum('bit,bjt->bij', x, y), axis=-1)  # (B, N)
        alpha = jax.nn.softmax(e, axis=1)
        wi = alpha * inputs[:, t, :]
        gates = wi @ Wih.T + bih + h @ Whh.T + bhh
        i_g = jax.nn.sigmoid(gates[:, 0 * M:1 * M])
        f_g = jax.nn.sigmoid(gates[:, 1 * M:2 * M])
        g_g = jnp.tanh(gates[:, 2 * M:3 * M])
        o_g = jax.nn.sigmoid(gates[:, 3 * M:4 * M])
        c = f_g * c + i_g * g_g
        h = o_g * jnp.tanh(c)
        outs.append(h)
    return jnp.stack(outs, axis=1)                          # (B, T, M)


if __name__ == "__main__":
    B, T, N, M = 2, 10, 8, 16

    key = jax.random.PRNGKey(0)
    ks = jax.random.split(key, 9)
    params = {
        "We_w": 0.1 * jax.random.normal(ks[0], (T, 2 * M), jnp.float32),
        "We_b": 0.1 * jax.random.normal(ks[1], (T,), jnp.float32),
        "Ue_w": 0.1 * jax.random.normal(ks[2], (T, T), jnp.float32),
        "Wih": 0.1 * jax.random.normal(ks[3], (4 * M, N), jnp.float32),
        "Whh": 0.1 * jax.random.normal(ks[4], (4 * M, M), jnp.float32),
        "bih": 0.1 * jax.random.normal(ks[5], (4 * M,), jnp.float32),
        "bhh": 0.1 * jax.random.normal(ks[6], (4 * M,), jnp.float32),
    }
    inputs = jax.random.normal(ks[7], (B, T, N), jnp.float32)

    ref = reference_forward(inputs, params)

    # Default f32 path (single batch tile).
    out = jax.block_until_ready(jax.jit(input_attention_encoder)(inputs, params))
    assert out.shape == (B, T, M)
    err = jnp.max(jnp.abs(out - ref))
    assert jnp.allclose(out, ref, atol=1e-5, rtol=1e-5), f"f32 max abs err {err}"

    # Multi-tile grid path (exercises batch tiling / "parallel" grid axis).
    B2 = 8
    inputs2 = jax.random.normal(ks[8], (B2, T, N), jnp.float32)
    ref2 = reference_forward(inputs2, params)
    out2 = jax.block_until_ready(
        jax.jit(functools.partial(input_attention_encoder, batch_tile=4))(
            inputs2, params))
    err2 = jnp.max(jnp.abs(out2 - ref2))
    assert jnp.allclose(out2, ref2, atol=1e-5, rtol=1e-5), f"tiled max abs err {err2}"

    # Optional bf16-weight path (v6e/v7x native MXU), f32 accumulation.
    out_bf = jax.block_until_ready(
        jax.jit(functools.partial(input_attention_encoder,
                                  use_bf16_weights=True))(inputs, params))
    err_bf = jnp.max(jnp.abs(out_bf - ref))
    assert jnp.allclose(out_bf, ref, atol=5e-2, rtol=5e-2), f"bf16 max abs err {err_bf}"

    print("KERNEL_OK")
</pallas_src>

<mosaic_0001>
module attributes {stable_mosaic.version = 11 : i64} {
  func.func @_encoder_kernel(%arg0: i32, %arg1: memref<1x8x20xf32, #tpu.memory_space<vmem>>, %arg2: memref<64x8xf32, #tpu.memory_space<vmem>>, %arg3: memref<64x16xf32, #tpu.memory_space<vmem>>, %arg4: memref<64x1xf32, #tpu.memory_space<vmem>>, %arg5: memref<1x10x16x2xf32, #tpu.memory_space<vmem>>, %arg6: memref<64x20xf32, #tpu.memory_space<vmem>>) attributes {dimension_semantics = [#tpu.dimension_semantics<parallel>], iteration_bounds = array<i64: 1>, scalar_prefetch = 0 : i64, scratch_operands = 1 : i64, tpu.core_type = #tpu.core_type<tc>, window_params = [{transform_indices = @transform_0, window_bounds = array<i64: 1, 8, 20>}, {pipeline_mode = #tpu.pipeline_mode<synchronous>, transform_indices = @transform_1, window_bounds = array<i64: 64, 8>}, {pipeline_mode = #tpu.pipeline_mode<synchronous>, transform_indices = @transform_2, window_bounds = array<i64: 64, 16>}, {pipeline_mode = #tpu.pipeline_mode<synchronous>, transform_indices = @transform_3, window_bounds = array<i64: 64, 1>}, {transform_indices = @transform_4, window_bounds = array<i64: 1, 10, 16, 2>}]} {
    %c0 = arith.constant 0 : index
    %c0_0 = arith.constant 0 : index
    %0 = vector.load %arg2[%c0, %c0_0] : memref<64x8xf32, #tpu.memory_space<vmem>>, vector<64x8xf32>
    %c0_1 = arith.constant 0 : index
    %c0_2 = arith.constant 0 : index
    %c0_3 = arith.constant 0 : index
    %1 = vector.load %arg1[%c0_1, %c0_2, %c0_3] : memref<1x8x20xf32, #tpu.memory_space<vmem>>, vector<1x8x20xf32>
    %2 = vector.shape_cast %1 : vector<1x8x20xf32> to vector<8x20xf32>
    %cst = arith.constant dense<0.000000e+00> : vector<64x20xf32>
    %3 = tpu.matmul %0, %2, %cst {dimension_numbers = #tpu.dot_dimension_numbers<[1], [0], [0], [1], [0, 0, 1, 1], [], []>} : vector<64x8xf32>, vector<8x20xf32>, vector<64x20xf32> -> vector<64x20xf32>
    %c0_4 = arith.constant 0 : index
    %c0_5 = arith.constant 0 : index
    %4 = vector.load %arg4[%c0_4, %c0_5] : memref<64x1xf32, #tpu.memory_space<vmem>>, vector<64x1xf32>
    %5 = vector.broadcast %4 : vector<64x1xf32> to vector<64x20xf32>
    %6 = arith.addf %3, %5 : vector<64x20xf32>
    %c0_6 = arith.constant 0 : index
    %c0_7 = arith.constant 0 : index
    %7 = vector.load %arg6[%c0_6, %c0_7] : memref<64x20xf32, #tpu.memory_space<vmem>>, vector<64x20xf32>
    tpu.vector_store %arg6[%c0_6, %c0_7], %6 {strides = array<i32>} : memref<64x20xf32, #tpu.memory_space<vmem>>, vector<64x20xf32>,
    %c0_8 = arith.constant 0 : index
    %c0_9 = arith.constant 0 : index
    %8 = vector.load %arg3[%c0_8, %c0_9] : memref<64x16xf32, #tpu.memory_space<vmem>>, vector<64x16xf32>
    %cst_10 = arith.constant 0.000000e+00 : f32
    %9 = vector.broadcast %cst_10 : f32 to vector<16x2xf32>
    %cst_11 = arith.constant 0.000000e+00 : f32
    %10 = vector.broadcast %cst_11 : f32 to vector<16x2xf32>
    %c0_12 = arith.constant 0 : index
    %c0_13 = arith.constant 0 : index
    %11 = vector.load %arg6[%c0_12, %c0_13] : memref<64x20xf32, #tpu.memory_space<vmem>>, vector<64x2xf32>
    %cst_14 = arith.constant dense<0.000000e+00> : vector<64x2xf32>
    %12 = tpu.matmul %8, %9, %cst_14 {dimension_numbers = #tpu.dot_dimension_numbers<[1], [0], [0], [1], [0, 0, 1, 1], [], []>} : vector<64x16xf32>, vector<16x2xf32>, vector<64x2xf32> -> vector<64x2xf32>
    %13 = arith.addf %11, %12 : vector<64x2xf32>
    %14 = vector.extract_strided_slice %13 {offsets = [0, 0], sizes = [48, 2], strides = [1, 1]} : vector<64x2xf32> to vector<48x2xf32>
    %15 = arith.negf %14 : vector<48x2xf32>
    %16 = math.exp %15 : vector<48x2xf32>
    %cst_15 = arith.constant 1.000000e+00 : f32
    %17 = vector.broadcast %cst_15 : f32 to vector<48x2xf32>
    %18 = arith.addf %17, %16 : vector<48x2xf32>
    %19 = arith.divf %17, %18 : vector<48x2xf32>
    %20 = vector.extract_strided_slice %13 {offsets = [48, 0], sizes = [16, 2], strides = [1, 1]} : vector<64x2xf32> to vector<16x2xf32>
    %21 = math.tanh %20 : vector<16x2xf32>
    %22 = vector.extract_strided_slice %19 {offsets = [16, 0], sizes = [16, 2], strides = [1, 1]} : vector<48x2xf32> to vector<16x2xf32>
    %23 = arith.mulf %22, %10 : vector<16x2xf32>
    %24 = vector.extract_strided_slice %19 {offsets = [0, 0], sizes = [16, 2], strides = [1, 1]} : vector<48x2xf32> to vector<16x2xf32>
    %25 = arith.mulf %24, %21 : vector<16x2xf32>
    %26 = arith.addf %23, %25 : vector<16x2xf32>
    %27 = vector.extract_strided_slice %19 {offsets = [32, 0], sizes = [16, 2], strides = [1, 1]} : vector<48x2xf32> to vector<16x2xf32>
    %28 = math.tanh %26 : vector<16x2xf32>
    %29 = arith.mulf %27, %28 : vector<16x2xf32>
    %c0_16 = arith.constant 0 : index
    %c0_17 = arith.constant 0 : index
    %c0_18 = arith.constant 0 : index
    %c0_19 = arith.constant 0 : index
    %30 = vector.load %arg5[%c0_16, %c0_17, %c0_18, %c0_19] : memref<1x10x16x2xf32, #tpu.memory_space<vmem>>, vector<1x1x16x2xf32>
    %31 = vector.shape_cast %30 : vector<1x1x16x2xf32> to vector<16x2xf32>
    %32 = vector.shape_cast %29 : vector<16x2xf32> to vector<1x1x16x2xf32>
    tpu.vector_store %arg5[%c0_16, %c0_17, %c0_18, %c0_19], %32 {strides = array<i32>} : memref<1x10x16x2xf32, #tpu.memory_space<vmem>>, vector<1x1x16x2xf32>,
    %c0_20 = arith.constant 0 : index
    %c2 = arith.constant 2 : index
    %33 = vector.load %arg6[%c0_20, %c2] : memref<64x20xf32, #tpu.memory_space<vmem>>, vector<64x2xf32>
    %cst_21 = arith.constant dense<0.000000e+00> : vector<64x2xf32>
    %34 = tpu.matmul %8, %29, %cst_21 {dimension_numbers = #tpu.dot_dimension_numbers<[1], [0], [0], [1], [0, 0, 1, 1], [], []>} : vector<64x16xf32>, vector<16x2xf32>, vector<64x2xf32> -> vector<64x2xf32>
    %35 = arith.addf %33, %34 : vector<64x2xf32>
    %36 = vector.extract_strided_slice %35 {offsets = [0, 0], sizes = [48, 2], strides = [1, 1]} : vector<64x2xf32> to vector<48x2xf32>
    %37 = arith.negf %36 : vector<48x2xf32>
    %38 = math.exp %37 : vector<48x2xf32>
    %cst_22 = arith.constant 1.000000e+00 : f32
    %39 = vector.broadcast %cst_22 : f32 to vector<48x2xf32>
    %40 = arith.addf %39, %38 : vector<48x2xf32>
    %41 = arith.divf %39, %40 : vector<48x2xf32>
    %42 = vector.extract_strided_slice %35 {offsets = [48, 0], sizes = [16, 2], strides = [1, 1]} : vector<64x2xf32> to vector<16x2xf32>
    %43 = math.tanh %42 : vector<16x2xf32>
    %44 = vector.extract_strided_slice %41 {offsets = [16, 0], sizes = [16, 2], strides = [1, 1]} : vector<48x2xf32> to vector<16x2xf32>
    %45 = arith.mulf %44, %26 : vector<16x2xf32>
    %46 = vector.extract_strided_slice %41 {offsets = [0, 0], sizes = [16, 2], strides = [1, 1]} : vector<48x2xf32> to vector<16x2xf32>
    %47 = arith.mulf %46, %43 : vector<16x2xf32>
    %48 = arith.addf %45, %47 : vector<16x2xf32>
    %49 = vector.extract_strided_slice %41 {offsets = [32, 0], sizes = [16, 2], strides = [1, 1]} : vector<48x2xf32> to vector<16x2xf32>
    %50 = math.tanh %48 : vector<16x2xf32>
    %51 = arith.mulf %49, %50 : vector<16x2xf32>
    %c0_23 = arith.constant 0 : index
    %c1 = arith.constant 1 : index
    %c0_24 = arith.constant 0 : index
    %c0_25 = arith.constant 0 : index
    %52 = vector.load %arg5[%c0_23, %c1, %c0_24, %c0_25] : memref<1x10x16x2xf32, #tpu.memory_space<vmem>>, vector<1x1x16x2xf32>
    %53 = vector.shape_cast %52 : vector<1x1x16x2xf32> to vector<16x2xf32>
    %54 = vector.shape_cast %51 : vector<16x2xf32> to vector<1x1x16x2xf32>
    tpu.vector_store %arg5[%c0_23, %c1, %c0_24, %c0_25], %54 {strides = array<i32>} : memref<1x10x16x2xf32, #tpu.memory_space<vmem>>, vector<1x1x16x2xf32>,
    %c0_26 = arith.constant 0 : index
    %c4 = arith.constant 4 : index
    %55 = vector.load %arg6[%c0_26, %c4] : memref<64x20xf32, #tpu.memory_space<vmem>>, vector<64x2xf32>
    %cst_27 = arith.constant dense<0.000000e+00> : vector<64x2xf32>
    %56 = tpu.matmul %8, %51, %cst_27 {dimension_numbers = #tpu.dot_dimension_numbers<[1], [0], [0], [1], [0, 0, 1, 1], [], []>} : vector<64x16xf32>, vector<16x2xf32>, vector<64x2xf32> -> vector<64x2xf32>
    %57 = arith.addf %55, %56 : vector<64x2xf32>
    %58 = vector.extract_strided_slice %57 {offsets = [0, 0], sizes = [48, 2], strides = [1, 1]} : vector<64x2xf32> to vector<48x2xf32>
    %59 = arith.negf %58 : vector<48x2xf32>
    %60 = math.exp %59 : vector<48x2xf32>
    %cst_28 = arith.constant 1.000000e+00 : f32
    %61 = vector.broadcast %cst_28 : f32 to vector<48x2xf32>
    %62 = arith.addf %61, %60 : vector<48x2xf32>
    %63 = arith.divf %61, %62 : vector<48x2xf32>
    %64 = vector.extract_strided_slice %57 {offsets = [48, 0], sizes = [16, 2], strides = [1, 1]} : vector<64x2xf32> to vector<16x2xf32>
    %65 = math.tanh %64 : vector<16x2xf32>
    %66 = vector.extract_strided_slice %63 {offsets = [16, 0], sizes = [16, 2], strides = [1, 1]} : vector<48x2xf32> to vector<16x2xf32>
    %67 = arith.mulf %66, %48 : vector<16x2xf32>
    %68 = vector.extract_strided_slice %63 {offsets = [0, 0], sizes = [16, 2], strides = [1, 1]} : vector<48x2xf32> to vector<16x2xf32>
    %69 = arith.mulf %68, %65 : vector<16x2xf32>
    %70 = arith.addf %67, %69 : vector<16x2xf32>
    %71 = vector.extract_strided_slice %63 {offsets = [32, 0], sizes = [16, 2], strides = [1, 1]} : vector<48x2xf32> to vector<16x2xf32>
    %72 = math.tanh %70 : vector<16x2xf32>
    %73 = arith.mulf %71, %72 : vector<16x2xf32>
    %c0_29 = arith.constant 0 : index
    %c2_30 = arith.constant 2 : index
    %c0_31 = arith.constant 0 : index
    %c0_32 = arith.constant 0 : index
    %74 = vector.load %arg5[%c0_29, %c2_30, %c0_31, %c0_32] : memref<1x10x16x2xf32, #tpu.memory_space<vmem>>, vector<1x1x16x2xf32>
    %75 = vector.shape_cast %74 : vector<1x1x16x2xf32> to vector<16x2xf32>
    %76 = vector.shape_cast %73 : vector<16x2xf32> to vector<1x1x16x2xf32>
    tpu.vector_store %arg5[%c0_29, %c2_30, %c0_31, %c0_32], %76 {strides = array<i32>} : memref<1x10x16x2xf32, #tpu.memory_space<vmem>>, vector<1x1x16x2xf32>,
    %c0_33 = arith.constant 0 : index
    %c6 = arith.constant 6 : index
    %77 = vector.load %arg6[%c0_33, %c6] : memref<64x20xf32, #tpu.memory_space<vmem>>, vector<64x2xf32>
    %cst_34 = arith.constant dense<0.000000e+00> : vector<64x2xf32>
    %78 = tpu.matmul %8, %73, %cst_34 {dimension_numbers = #tpu.dot_dimension_numbers<[1], [0], [0], [1], [0, 0, 1, 1], [], []>} : vector<64x16xf32>, vector<16x2xf32>, vector<64x2xf32> -> vector<64x2xf32>
    %79 = arith.addf %77, %78 : vector<64x2xf32>
    %80 = vector.extract_strided_slice %79 {offsets = [0, 0], sizes = [48, 2], strides = [1, 1]} : vector<64x2xf32> to vector<48x2xf32>
    %81 = arith.negf %80 : vector<48x2xf32>
    %82 = math.exp %81 : vector<48x2xf32>
    %cst_35 = arith.constant 1.000000e+00 : f32
    %83 = vector.broadcast %cst_35 : f32 to vector<48x2xf32>
    %84 = arith.addf %83, %82 : vector<48x2xf32>
    %85 = arith.divf %83, %84 : vector<48x2xf32>
    %86 = vector.extract_strided_slice %79 {offsets = [48, 0], sizes = [16, 2], strides = [1, 1]} : vector<64x2xf32> to vector<16x2xf32>
    %87 = math.tanh %86 : vector<16x2xf32>
    %88 = vector.extract_strided_slice %85 {offsets = [16, 0], sizes = [16, 2], strides = [1, 1]} : vector<48x2xf32> to vector<16x2xf32>
    %89 = arith.mulf %88, %70 : vector<16x2xf32>
    %90 = vector.extract_strided_slice %85 {offsets = [0, 0], sizes = [16, 2], strides = [1, 1]} : vector<48x2xf32> to vector<16x2xf32>
    %91 = arith.mulf %90, %87 : vector<16x2xf32>
    %92 = arith.addf %89, %91 : vector<16x2xf32>
    %93 = vector.extract_strided_slice %85 {offsets = [32, 0], sizes = [16, 2], strides = [1, 1]} : vector<48x2xf32> to vector<16x2xf32>
    %94 = math.tanh %92 : vector<16x2xf32>
    %95 = arith.mulf %93, %94 : vector<16x2xf32>
    %c0_36 = arith.constant 0 : index
    %c3 = arith.constant 3 : index
    %c0_37 = arith.constant 0 : index
    %c0_38 = arith.constant 0 : index
    %96 = vector.load %arg5[%c0_36, %c3, %c0_37, %c0_38] : memref<1x10x16x2xf32, #tpu.memory_space<vmem>>, vector<1x1x16x2xf32>
    %97 = vector.shape_cast %96 : vector<1x1x16x2xf32> to vector<16x2xf32>
    %98 = vector.shape_cast %95 : vector<16x2xf32> to vector<1x1x16x2xf32>
    tpu.vector_store %arg5[%c0_36, %c3, %c0_37, %c0_38], %98 {strides = array<i32>} : memref<1x10x16x2xf32, #tpu.memory_space<vmem>>, vector<1x1x16x2xf32>,
    %c0_39 = arith.constant 0 : index
    %c8 = arith.constant 8 : index
    %99 = vector.load %arg6[%c0_39, %c8] : memref<64x20xf32, #tpu.memory_space<vmem>>, vector<64x2xf32>
    %cst_40 = arith.constant dense<0.000000e+00> : vector<64x2xf32>
    %100 = tpu.matmul %8, %95, %cst_40 {dimension_numbers = #tpu.dot_dimension_numbers<[1], [0], [0], [1], [0, 0, 1, 1], [], []>} : vector<64x16xf32>, vector<16x2xf32>, vector<64x2xf32> -> vector<64x2xf32>
    %101 = arith.addf %99, %100 : vector<64x2xf32>
    %102 = vector.extract_strided_slice %101 {offsets = [0, 0], sizes = [48, 2], strides = [1, 1]} : vector<64x2xf32> to vector<48x2xf32>
    %103 = arith.negf %102 : vector<48x2xf32>
    %104 = math.exp %103 : vector<48x2xf32>
    %cst_41 = arith.constant 1.000000e+00 : f32
    %105 = vector.broadcast %cst_41 : f32 to vector<48x2xf32>
    %106 = arith.addf %105, %104 : vector<48x2xf32>
    %107 = arith.divf %105, %106 : vector<48x2xf32>
    %108 = vector.extract_strided_slice %101 {offsets = [48, 0], sizes = [16, 2], strides = [1, 1]} : vector<64x2xf32> to vector<16x2xf32>
    %109 = math.tanh %108 : vector<16x2xf32>
    %110 = vector.extract_strided_slice %107 {offsets = [16, 0], sizes = [16, 2], strides = [1, 1]} : vector<48x2xf32> to vector<16x2xf32>
    %111 = arith.mulf %110, %92 : vector<16x2xf32>
    %112 = vector.extract_strided_slice %107 {offsets = [0, 0], sizes = [16, 2], strides = [1, 1]} : vector<48x2xf32> to vector<16x2xf32>
    %113 = arith.mulf %112, %109 : vector<16x2xf32>
    %114 = arith.addf %111, %113 : vector<16x2xf32>
    %115 = vector.extract_strided_slice %107 {offsets = [32, 0], sizes = [16, 2], strides = [1, 1]} : vector<48x2xf32> to vector<16x2xf32>
    %116 = math.tanh %114 : vector<16x2xf32>
    %117 = arith.mulf %115, %116 : vector<16x2xf32>
    %c0_42 = arith.constant 0 : index
    %c4_43 = arith.constant 4 : index
    %c0_44 = arith.constant 0 : index
    %c0_45 = arith.constant 0 : index
    %118 = vector.load %arg5[%c0_42, %c4_43, %c0_44, %c0_45] : memref<1x10x16x2xf32, #tpu.memory_space<vmem>>, vector<1x1x16x2xf32>
    %119 = vector.shape_cast %118 : vector<1x1x16x2xf32> to vector<16x2xf32>
    %120 = vector.shape_cast %117 : vector<16x2xf32> to vector<1x1x16x2xf32>
    tpu.vector_store %arg5[%c0_42, %c4_43, %c0_44, %c0_45], %120 {strides = array<i32>} : memref<1x10x16x2xf32, #tpu.memory_space<vmem>>, vector<1x1x16x2xf32>,
    %c0_46 = arith.constant 0 : index
    %c10 = arith.constant 10 : index
    %121 = vector.load %arg6[%c0_46, %c10] : memref<64x20xf32, #tpu.memory_space<vmem>>, vector<64x2xf32>
    %cst_47 = arith.constant dense<0.000000e+00> : vector<64x2xf32>
    %122 = tpu.matmul %8, %117, %cst_47 {dimension_numbers = #tpu.dot_dimension_numbers<[1], [0], [0], [1], [0, 0, 1, 1], [], []>} : vector<64x16xf32>, vector<16x2xf32>, vector<64x2xf32> -> vector<64x2xf32>
    %123 = arith.addf %121, %122 : vector<64x2xf32>
    %124 = vector.extract_strided_slice %123 {offsets = [0, 0], sizes = [48, 2], strides = [1, 1]} : vector<64x2xf32> to vector<48x2xf32>
    %125 = arith.negf %124 : vector<48x2xf32>
    %126 = math.exp %125 : vector<48x2xf32>
    %cst_48 = arith.constant 1.000000e+00 : f32
    %127 = vector.broadcast %cst_48 : f32 to vector<48x2xf32>
    %128 = arith.addf %127, %126 : vector<48x2xf32>
    %129 = arith.divf %127, %128 : vector<48x2xf32>
    %130 = vector.extract_strided_slice %123 {offsets = [48, 0], sizes = [16, 2], strides = [1, 1]} : vector<64x2xf32> to vector<16x2xf32>
    %131 = math.tanh %130 : vector<16x2xf32>
    %132 = vector.extract_strided_slice %129 {offsets = [16, 0], sizes = [16, 2], strides = [1, 1]} : vector<48x2xf32> to vector<16x2xf32>
    %133 = arith.mulf %132, %114 : vector<16x2xf32>
    %134 = vector.extract_strided_slice %129 {offsets = [0, 0], sizes = [16, 2], strides = [1, 1]} : vector<48x2xf32> to vector<16x2xf32>
    %135 = arith.mulf %134, %131 : vector<16x2xf32>
    %136 = arith.addf %133, %135 : vector<16x2xf32>
    %137 = vector.extract_strided_slice %129 {offsets = [32, 0], sizes = [16, 2], strides = [1, 1]} : vector<48x2xf32> to vector<16x2xf32>
    %138 = math.tanh %136 : vector<16x2xf32>
    %139 = arith.mulf %137, %138 : vector<16x2xf32>
    %c0_49 = arith.constant 0 : index
    %c5 = arith.constant 5 : index
    %c0_50 = arith.constant 0 : index
    %c0_51 = arith.constant 0 : index
    %140 = vector.load %arg5[%c0_49, %c5, %c0_50, %c0_51] : memref<1x10x16x2xf32, #tpu.memory_space<vmem>>, vector<1x1x16x2xf32>
    %141 = vector.shape_cast %140 : vector<1x1x16x2xf32> to vector<16x2xf32>
    %142 = vector.shape_cast %139 : vector<16x2xf32> to vector<1x1x16x2xf32>
    tpu.vector_store %arg5[%c0_49, %c5, %c0_50, %c0_51], %142 {strides = array<i32>} : memref<1x10x16x2xf32, #tpu.memory_space<vmem>>, vector<1x1x16x2xf32>,
    %c0_52 = arith.constant 0 : index
    %c12 = arith.constant 12 : index
    %143 = vector.load %arg6[%c0_52, %c12] : memref<64x20xf32, #tpu.memory_space<vmem>>, vector<64x2xf32>
    %cst_53 = arith.constant dense<0.000000e+00> : vector<64x2xf32>
    %144 = tpu.matmul %8, %139, %cst_53 {dimension_numbers = #tpu.dot_dimension_numbers<[1], [0], [0], [1], [0, 0, 1, 1], [], []>} : vector<64x16xf32>, vector<16x2xf32>, vector<64x2xf32> -> vector<64x2xf32>
    %145 = arith.addf %143, %144 : vector<64x2xf32>
    %146 = vector.extract_strided_slice %145 {offsets = [0, 0], sizes = [48, 2], strides = [1, 1]} : vector<64x2xf32> to vector<48x2xf32>
    %147 = arith.negf %146 : vector<48x2xf32>
    %148 = math.exp %147 : vector<48x2xf32>
    %cst_54 = arith.constant 1.000000e+00 : f32
    %149 = vector.broadcast %cst_54 : f32 to vector<48x2xf32>
    %150 = arith.addf %149, %148 : vector<48x2xf32>
    %151 = arith.divf %149, %150 : vector<48x2xf32>
    %152 = vector.extract_strided_slice %145 {offsets = [48, 0], sizes = [16, 2], strides = [1, 1]} : vector<64x2xf32> to vector<16x2xf32>
    %153 = math.tanh %152 : vector<16x2xf32>
    %154 = vector.extract_strided_slice %151 {offsets = [16, 0], sizes = [16, 2], strides = [1, 1]} : vector<48x2xf32> to vector<16x2xf32>
    %155 = arith.mulf %154, %136 : vector<16x2xf32>
    %156 = vector.extract_strided_slice %151 {offsets = [0, 0], sizes = [16, 2], strides = [1, 1]} : vector<48x2xf32> to vector<16x2xf32>
    %157 = arith.mulf %156, %153 : vector<16x2xf32>
    %158 = arith.addf %155, %157 : vector<16x2xf32>
    %159 = vector.extract_strided_slice %151 {offsets = [32, 0], sizes = [16, 2], strides = [1, 1]} : vector<48x2xf32> to vector<16x2xf32>
    %160 = math.tanh %158 : vector<16x2xf32>
    %161 = arith.mulf %159, %160 : vector<16x2xf32>
    %c0_55 = arith.constant 0 : index
    %c6_56 = arith.constant 6 : index
    %c0_57 = arith.constant 0 : index
    %c0_58 = arith.constant 0 : index
    %162 = vector.load %arg5[%c0_55, %c6_56, %c0_57, %c0_58] : memref<1x10x16x2xf32, #tpu.memory_space<vmem>>, vector<1x1x16x2xf32>
    %163 = vector.shape_cast %162 : vector<1x1x16x2xf32> to vector<16x2xf32>
    %164 = vector.shape_cast %161 : vector<16x2xf32> to vector<1x1x16x2xf32>
    tpu.vector_store %arg5[%c0_55, %c6_56, %c0_57, %c0_58], %164 {strides = array<i32>} : memref<1x10x16x2xf32, #tpu.memory_space<vmem>>, vector<1x1x16x2xf32>,
    %c0_59 = arith.constant 0 : index
    %c14 = arith.constant 14 : index
    %165 = vector.load %arg6[%c0_59, %c14] : memref<64x20xf32, #tpu.memory_space<vmem>>, vector<64x2xf32>
    %cst_60 = arith.constant dense<0.000000e+00> : vector<64x2xf32>
    %166 = tpu.matmul %8, %161, %cst_60 {dimension_numbers = #tpu.dot_dimension_numbers<[1], [0], [0], [1], [0, 0, 1, 1], [], []>} : vector<64x16xf32>, vector<16x2xf32>, vector<64x2xf32> -> vector<64x2xf32>
    %167 = arith.addf %165, %166 : vector<64x2xf32>
    %168 = vector.extract_strided_slice %167 {offsets = [0, 0], sizes = [48, 2], strides = [1, 1]} : vector<64x2xf32> to vector<48x2xf32>
    %169 = arith.negf %168 : vector<48x2xf32>
    %170 = math.exp %169 : vector<48x2xf32>
    %cst_61 = arith.constant 1.000000e+00 : f32
    %171 = vector.broadcast %cst_61 : f32 to vector<48x2xf32>
    %172 = arith.addf %171, %170 : vector<48x2xf32>
    %173 = arith.divf %171, %172 : vector<48x2xf32>
    %174 = vector.extract_strided_slice %167 {offsets = [48, 0], sizes = [16, 2], strides = [1, 1]} : vector<64x2xf32> to vector<16x2xf32>
    %175 = math.tanh %174 : vector<16x2xf32>
    %176 = vector.extract_strided_slice %173 {offsets = [16, 0], sizes = [16, 2], strides = [1, 1]} : vector<48x2xf32> to vector<16x2xf32>
    %177 = arith.mulf %176, %158 : vector<16x2xf32>
    %178 = vector.extract_strided_slice %173 {offsets = [0, 0], sizes = [16, 2], strides = [1, 1]} : vector<48x2xf32> to vector<16x2xf32>
    %179 = arith.mulf %178, %175 : vector<16x2xf32>
    %180 = arith.addf %177, %179 : vector<16x2xf32>
    %181 = vector.extract_strided_slice %173 {offsets = [32, 0], sizes = [16, 2], strides = [1, 1]} : vector<48x2xf32> to vector<16x2xf32>
    %182 = math.tanh %180 : vector<16x2xf32>
    %183 = arith.mulf %181, %182 : vector<16x2xf32>
    %c0_62 = arith.constant 0 : index
    %c7 = arith.constant 7 : index
    %c0_63 = arith.constant 0 : index
    %c0_64 = arith.constant 0 : index
    %184 = vector.load %arg5[%c0_62, %c7, %c0_63, %c0_64] : memref<1x10x16x2xf32, #tpu.memory_space<vmem>>, vector<1x1x16x2xf32>
    %185 = vector.shape_cast %184 : vector<1x1x16x2xf32> to vector<16x2xf32>
    %186 = vector.shape_cast %183 : vector<16x2xf32> to vector<1x1x16x2xf32>
    tpu.vector_store %arg5[%c0_62, %c7, %c0_63, %c0_64], %186 {strides = array<i32>} : memref<1x10x16x2xf32, #tpu.memory_space<vmem>>, vector<1x1x16x2xf32>,
    %c0_65 = arith.constant 0 : index
    %c16 = arith.constant 16 : index
    %187 = vector.load %arg6[%c0_65, %c16] : memref<64x20xf32, #tpu.memory_space<vmem>>, vector<64x2xf32>
    %cst_66 = arith.constant dense<0.000000e+00> : vector<64x2xf32>
    %188 = tpu.matmul %8, %183, %cst_66 {dimension_numbers = #tpu.dot_dimension_numbers<[1], [0], [0], [1], [0, 0, 1, 1], [], []>} : vector<64x16xf32>, vector<16x2xf32>, vector<64x2xf32> -> vector<64x2xf32>
    %189 = arith.addf %187, %188 : vector<64x2xf32>
    %190 = vector.extract_strided_slice %189 {offsets = [0, 0], sizes = [48, 2], strides = [1, 1]} : vector<64x2xf32> to vector<48x2xf32>
    %191 = arith.negf %190 : vector<48x2xf32>
    %192 = math.exp %191 : vector<48x2xf32>
    %cst_67 = arith.constant 1.000000e+00 : f32
    %193 = vector.broadcast %cst_67 : f32 to vector<48x2xf32>
    %194 = arith.addf %193, %192 : vector<48x2xf32>
    %195 = arith.divf %193, %194 : vector<48x2xf32>
    %196 = vector.extract_strided_slice %189 {offsets = [48, 0], sizes = [16, 2], strides = [1, 1]} : vector<64x2xf32> to vector<16x2xf32>
    %197 = math.tanh %196 : vector<16x2xf32>
    %198 = vector.extract_strided_slice %195 {offsets = [16, 0], sizes = [16, 2], strides = [1, 1]} : vector<48x2xf32> to vector<16x2xf32>
    %199 = arith.mulf %198, %180 : vector<16x2xf32>
    %200 = vector.extract_strided_slice %195 {offsets = [0, 0], sizes = [16, 2], strides = [1, 1]} : vector<48x2xf32> to vector<16x2xf32>
    %201 = arith.mulf %200, %197 : vector<16x2xf32>
    %202 = arith.addf %199, %201 : vector<16x2xf32>
    %203 = vector.extract_strided_slice %195 {offsets = [32, 0], sizes = [16, 2], strides = [1, 1]} : vector<48x2xf32> to vector<16x2xf32>
    %204 = math.tanh %202 : vector<16x2xf32>
    %205 = arith.mulf %203, %204 : vector<16x2xf32>
    %c0_68 = arith.constant 0 : index
    %c8_69 = arith.constant 8 : index
    %c0_70 = arith.constant 0 : index
    %c0_71 = arith.constant 0 : index
    %206 = vector.load %arg5[%c0_68, %c8_69, %c0_70, %c0_71] : memref<1x10x16x2xf32, #tpu.memory_space<vmem>>, vector<1x1x16x2xf32>
    %207 = vector.shape_cast %206 : vector<1x1x16x2xf32> to vector<16x2xf32>
    %208 = vector.shape_cast %205 : vector<16x2xf32> to vector<1x1x16x2xf32>
    tpu.vector_store %arg5[%c0_68, %c8_69, %c0_70, %c0_71], %208 {strides = array<i32>} : memref<1x10x16x2xf32, #tpu.memory_space<vmem>>, vector<1x1x16x2xf32>,
    %c0_72 = arith.constant 0 : index
    %c18 = arith.constant 18 : index
    %209 = vector.load %arg6[%c0_72, %c18] : memref<64x20xf32, #tpu.memory_space<vmem>>, vector<64x2xf32>
    %cst_73 = arith.constant dense<0.000000e+00> : vector<64x2xf32>
    %210 = tpu.matmul %8, %205, %cst_73 {dimension_numbers = #tpu.dot_dimension_numbers<[1], [0], [0], [1], [0, 0, 1, 1], [], []>} : vector<64x16xf32>, vector<16x2xf32>, vector<64x2xf32> -> vector<64x2xf32>
    %211 = arith.addf %209, %210 : vector<64x2xf32>
    %212 = vector.extract_strided_slice %211 {offsets = [0, 0], sizes = [48, 2], strides = [1, 1]} : vector<64x2xf32> to vector<48x2xf32>
    %213 = arith.negf %212 : vector<48x2xf32>
    %214 = math.exp %213 : vector<48x2xf32>
    %cst_74 = arith.constant 1.000000e+00 : f32
    %215 = vector.broadcast %cst_74 : f32 to vector<48x2xf32>
    %216 = arith.addf %215, %214 : vector<48x2xf32>
    %217 = arith.divf %215, %216 : vector<48x2xf32>
    %218 = vector.extract_strided_slice %211 {offsets = [48, 0], sizes = [16, 2], strides = [1, 1]} : vector<64x2xf32> to vector<16x2xf32>
    %219 = math.tanh %218 : vector<16x2xf32>
    %220 = vector.extract_strided_slice %217 {offsets = [16, 0], sizes = [16, 2], strides = [1, 1]} : vector<48x2xf32> to vector<16x2xf32>
    %221 = arith.mulf %220, %202 : vector<16x2xf32>
    %222 = vector.extract_strided_slice %217 {offsets = [0, 0], sizes = [16, 2], strides = [1, 1]} : vector<48x2xf32> to vector<16x2xf32>
    %223 = arith.mulf %222, %219 : vector<16x2xf32>
    %224 = arith.addf %221, %223 : vector<16x2xf32>
    %225 = vector.extract_strided_slice %217 {offsets = [32, 0], sizes = [16, 2], strides = [1, 1]} : vector<48x2xf32> to vector<16x2xf32>
    %226 = math.tanh %224 : vector<16x2xf32>
    %227 = arith.mulf %225, %226 : vector<16x2xf32>
    %c0_75 = arith.constant 0 : index
    %c9 = arith.constant 9 : index
    %c0_76 = arith.constant 0 : index
    %c0_77 = arith.constant 0 : index
    %228 = vector.load %arg5[%c0_75, %c9, %c0_76, %c0_77] : memref<1x10x16x2xf32, #tpu.memory_space<vmem>>, vector<1x1x16x2xf32>
    %229 = vector.shape_cast %228 : vector<1x1x16x2xf32> to vector<16x2xf32>
    %230 = vector.shape_cast %227 : vector<16x2xf32> to vector<1x1x16x2xf32>
    tpu.vector_store %arg5[%c0_75, %c9, %c0_76, %c0_77], %230 {strides = array<i32>} : memref<1x10x16x2xf32, #tpu.memory_space<vmem>>, vector<1x1x16x2xf32>,
    return
  }
  func.func @transform_0(%arg0: i32) -> (i32, i32, i32) {
    %c0_i32 = arith.constant 0 : i32
    %c0_i32_0 = arith.constant 0 : i32
    %c0_i32_1 = arith.constant 0 : i32
    return %arg0, %c0_i32, %c0_i32_0 : i32, i32, i32
  }
  func.func @transform_1(%arg0: i32) -> (i32, i32) {
    %c0_i32 = arith.constant 0 : i32
    %c0_i32_0 = arith.constant 0 : i32
    %c0_i32_1 = arith.constant 0 : i32
    return %c0_i32, %c0_i32_0 : i32, i32
  }
  func.func @transform_2(%arg0: i32) -> (i32, i32) {
    %c0_i32 = arith.constant 0 : i32
    %c0_i32_0 = arith.constant 0 : i32
    %c0_i32_1 = arith.constant 0 : i32
    return %c0_i32, %c0_i32_0 : i32, i32
  }
  func.func @transform_3(%arg0: i32) -> (i32, i32) {
    %c0_i32 = arith.constant 0 : i32
    %c0_i32_0 = arith.constant 0 : i32
    %c0_i32_1 = arith.constant 0 : i32
    return %c0_i32, %c0_i32_0 : i32, i32
  }
  func.func @transform_4(%arg0: i32) -> (i32, i32, i32, i32) {
    %c0_i32 = arith.constant 0 : i32
    %c0_i32_0 = arith.constant 0 : i32
    %c0_i32_1 = arith.constant 0 : i32
    %c0_i32_2 = arith.constant 0 : i32
    return %arg0, %c0_i32, %c0_i32_0, %c0_i32_1 : i32, i32, i32, i32
  }
}

</mosaic_0001>

<llo_original>
// kernel: input_attention_encoder.1
$region0: #{input_attention_encoder.1}
  #allocation0 [shape = 'u32[]', space=smem, size = 0x4, offset = 0x4, fixed_abs, tag = 'smem constant byte address 0x4 - core index']
  #allocation1 [shape = 'u32[144,128]{1,0:T(1,128)}', space=vmem, size = 0x12000, scoped, tag = 'internal scratch']
  #allocation2 [shape = 'f32[64,20]{1,0:T(8,128)}', space=vmem, size = 0x8000, scoped, tag = 'scratch operand']
  %s0 = inlined_call_operand.vmem [shape: f32[1,8,20], index: 0, kind: input, shape index: {}]
  %s1 = inlined_call_operand.vmem [shape: f32[64,8], index: 1, kind: input, shape index: {}]
  %s2 = inlined_call_operand.vmem [shape: f32[64,16], index: 2, kind: input, shape index: {}]
  %s3 = inlined_call_operand.vmem [shape: f32[64,1], index: 3, kind: input, shape index: {}]
  %s4 = inlined_call_operand.vmem [shape: f32[1,10,16,2], index: 4, kind: output, shape index: {}]
  %s5 = sld [smem:[#allocation0]]
  $region26: #{input_attention_encoder.1} parent=0
    _
  %s7 = ssub.s32 1, %s5
  %s8 = scalar_select 0, %s7, %s5
  // Predicated region
  $region2: #{input_attention_encoder.1} parent=0 // pred_check
    _
  $region3: #{input_attention_encoder.1} parent=0 // pred_check_branch
    %10 = sbr.rel (0) target = $region5
  $region4: #{input_attention_encoder.1} parent=0 // pred_region
    _
  $region5: #{input_attention_encoder.1} parent=0 // pred_fallthru
    _
  // Predicated region
  $region6: #{input_attention_encoder.1} parent=0 // pred_check
    _
  $region7: #{input_attention_encoder.1} parent=0 // pred_check_branch
    %12 = sbr.rel (0) target = $region9
  $region8: #{input_attention_encoder.1} parent=0 // pred_region
    _
  $region9: #{input_attention_encoder.1} parent=0 // pred_fallthru
    _
  // Predicated region
  $region10: #{input_attention_encoder.1} parent=0 // pred_check
    _
  $region11: #{input_attention_encoder.1} parent=0 // pred_check_branch
    %14 = sbr.rel (0) target = $region13
  $region12: #{input_attention_encoder.1} parent=0 // pred_region
    _
  $region13: #{input_attention_encoder.1} parent=0 // pred_fallthru
    _
  // Predicated region
  $region14: #{input_attention_encoder.1} parent=0 // pred_check
    _
  $region15: #{input_attention_encoder.1} parent=0 // pred_check_branch
    %16 = sbr.rel (0) target = $region17
  $region16: #{input_attention_encoder.1} parent=0 // pred_region
    _
  $region17: #{input_attention_encoder.1} parent=0 // pred_fallthru
    _
  %v17 = vld [vmem:[%s1] sm:$0xff]
  %v18 = vld [vmem:[%s1 + $0x8] sm:$0xff]
  %v19 = vld [vmem:[%s1 + $0x10] sm:$0xff]
  %v20 = vld [vmem:[%s1 + $0x18] sm:$0xff]
  %v21 = vld [vmem:[%s1 + $0x20] sm:$0xff]
  %v22 = vld [vmem:[%s1 + $0x28] sm:$0xff]
  %v23 = vld [vmem:[%s1 + $0x30] sm:$0xff]
  %v24 = vld [vmem:[%s1 + $0x38] sm:$0xff]
  %v25 = vld [vmem:[%s0] sm:$0xff]
  %v26 = vld [vmem:[%s3] sm:$0xff]
  %v27 = vld [vmem:[%s3 + $0x8] sm:$0xff]
  %v28 = vld [vmem:[%s3 + $0x10] sm:$0xff]
  %v29 = vld [vmem:[%s3 + $0x18] sm:$0xff]
  %v30 = vld [vmem:[%s3 + $0x20] sm:$0xff]
  %v31 = vld [vmem:[%s3 + $0x28] sm:$0xff]
  %v32 = vld [vmem:[%s3 + $0x30] sm:$0xff]
  %v33 = vld [vmem:[%s3 + $0x38] sm:$0xff]
  %35 = vset.pattern.permute.xlu0 0
  %36 = vperm.xlu0 %35, %v26
  %v37 = vpop.permute.xlu0 %36
  %40 = vset.pattern.permute.xlu0 0
  %41 = vperm.xlu0 %40, %v27
  %v42 = vpop.permute.xlu0 %41
  %45 = vset.pattern.permute.xlu0 0
  %46 = vperm.xlu0 %45, %v28
  %v47 = vpop.permute.xlu0 %46
  %50 = vset.pattern.permute.xlu0 0
  %51 = vperm.xlu0 %50, %v29
  %v52 = vpop.permute.xlu0 %51
  %55 = vset.pattern.permute.xlu0 0
  %56 = vperm.xlu0 %55, %v30
  %v57 = vpop.permute.xlu0 %56
  %60 = vset.pattern.permute.xlu0 0
  %61 = vperm.xlu0 %60, %v31
  %v62 = vpop.permute.xlu0 %61
  %65 = vset.pattern.permute.xlu0 0
  %66 = vperm.xlu0 %65, %v32
  %v67 = vpop.permute.xlu0 %66
  %70 = vset.pattern.permute.xlu0 0
  %71 = vperm.xlu0 %70, %v33
  %v72 = vpop.permute.xlu0 %71
  %vm74 = vcmask 64512
  %v76 = vsel %vm74, %v17, 0
  %v79 = vsel %vm74, %v18, 0
  %v82 = vsel %vm74, %v19, 0
  %v85 = vsel %vm74, %v20, 0
  %v88 = vsel %vm74, %v21, 0
  %v91 = vsel %vm74, %v22, 0
  %v94 = vsel %vm74, %v23, 0
  %v97 = vsel %vm74, %v24, 0
  %99 = vmatprep.subr.mxu0 0.0
  %100 = vmatpush1.msra.mxu0 %v25
  %101 = vmatprep.subr.mxu0 0.0
  %102 = vmatpush1.msra.mxu0 0.0
  %103 = vmatprep.subr.mxu0 0.0
  %104 = vmatpush1.msra.mxu0 0.0
  %105 = vmatprep.subr.mxu0 0.0
  %106 = vmatpush1.msra.mxu0 0.0
  %107 = vmatprep.subr.mxu0 0.0
  %108 = vmatpush1.msra.mxu0 0.0
  %109 = vmatprep.subr.mxu0 0.0
  %110 = vmatpush1.msra.mxu0 0.0
  %111 = vmatprep.subr.mxu0 0.0
  %112 = vmatpush1.msra.mxu0 0.0
  %113 = vmatprep.subr.mxu0 0.0
  %114 = vmatpush1.msra.mxu0 0.0
  %115 = vmatprep.subr.mxu0 0.0
  %116 = vmatpush1.msra.mxu0 0.0
  %117 = vmatprep.subr.mxu0 0.0
  %118 = vmatpush1.msra.mxu0 0.0
  %119 = vmatprep.subr.mxu0 0.0
  %120 = vmatpush1.msra.mxu0 0.0
  %121 = vmatprep.subr.mxu0 0.0
  %122 = vmatpush1.msra.mxu0 0.0
  %123 = vmatprep.subr.mxu0 0.0
  %124 = vmatpush1.msra.mxu0 0.0
  %125 = vmatprep.subr.mxu0 0.0
  %126 = vmatpush1.msra.mxu0 0.0
  %127 = vmatprep.subr.mxu0 0.0
  %128 = vmatpush1.msra.mxu0 0.0
  %129 = vmatprep.subr.mxu0 0.0
  %130 = vmatpush1.msra.mxu0 0.0
  %131 = vmatprep.subr.mxu0 0.0
  %132 = vmatpush1.msra.mxu0 0.0
  %133 = vmatprep.subr.mxu0 0.0
  %134 = vmatpush1.msra.mxu0 0.0
  %135 = vmatprep.subr.mxu0 0.0
  %136 = vmatpush1.msra.mxu0 0.0
  %137 = vmatprep.subr.mxu0 0.0
  %138 = vmatpush1.msra.mxu0 0.0
  %139 = vmatprep.subr.mxu0 0.0
  %140 = vmatpush1.msra.mxu0 0.0
  %141 = vmatprep.subr.mxu0 0.0
  %142 = vmatpush1.msra.mxu0 0.0
  %143 = vmatprep.subr.mxu0 0.0
  %144 = vmatpush1.msra.mxu0 0.0
  %145 = vmatprep.subr.mxu0 0.0
  %146 = vmatpush1.msra.mxu0 0.0
  %147 = vmatprep.subr.mxu0 0.0
  %148 = vmatpush1.msra.mxu0 0.0
  %149 = vmatprep.subr.mxu0 0.0
  %150 = vmatpush1.msra.mxu0 0.0
  %151 = vmatprep.subr.mxu0 0.0
  %152 = vmatpush1.msra.mxu0 0.0
  %153 = vmatprep.subr.mxu0 0.0
  %154 = vmatpush1.msra.mxu0 0.0
  %155 = vmatprep.subr.mxu0 0.0
  %156 = vmatpush1.msra.mxu0 0.0
  %157 = vmatprep.subr.mxu0 0.0
  %158 = vmatpush1.msra.mxu0 0.0
  %159 = vmatprep.subr.mxu0 0.0
  %160 = vmatpush1.msra.mxu0 0.0
  %161 = vmatprep.subr.mxu0 0.0
  %162 = vmatpush1.msra.mxu0 0.0
  %163 = vmatprep.mubr.f32.mxu0 0.0
  %164 = vmatmul.mubr.f32.gmra.mrb[0].mxu0 %v76
  %v165 = vpop.f32.mrb[0].mxu0
  %v166 = vadd.f32 %v37, %v165
  %v167 = vpop.f32.mrb[0].mxu0
  %168 = vmatprep.mubr.f32.mxu0 0.0
  %169 = vmatmul.mubr.f32.gmra.mrb[0].mxu0 %v79
  %v170 = vpop.f32.mrb[0].mxu0
  %v171 = vadd.f32 %v42, %v170
  %v172 = vpop.f32.mrb[0].mxu0
  %173 = vmatprep.mubr.f32.mxu0 0.0
  %174 = vmatmul.mubr.f32.gmra.mrb[0].mxu0 %v82
  %v175 = vpop.f32.mrb[0].mxu0
  %v176 = vadd.f32 %v47, %v175
  %v177 = vpop.f32.mrb[0].mxu0
  %178 = vmatprep.mubr.f32.mxu0 0.0
  %179 = vmatmul.mubr.f32.gmra.mrb[0].mxu0 %v85
  %v180 = vpop.f32.mrb[0].mxu0
  %v181 = vadd.f32 %v52, %v180
  %v182 = vpop.f32.mrb[0].mxu0
  %183 = vmatprep.mubr.f32.mxu0 0.0
  %184 = vmatmul.mubr.f32.gmra.mrb[0].mxu0 %v88
  %v185 = vpop.f32.mrb[0].mxu0
  %v186 = vadd.f32 %v57, %v185
  %v187 = vpop.f32.mrb[0].mxu0
  %188 = vmatprep.mubr.f32.mxu0 0.0
  %189 = vmatmul.mubr.f32.gmra.mrb[0].mxu0 %v91
  %v190 = vpop.f32.mrb[0].mxu0
  %v191 = vadd.f32 %v62, %v190
  %v192 = vpop.f32.mrb[0].mxu0
  %193 = vmatprep.mubr.f32.mxu0 0.0
  %194 = vmatmul.mubr.f32.gmra.mrb[0].mxu0 %v94
  %v195 = vpop.f32.mrb[0].mxu0
  %v196 = vadd.f32 %v67, %v195
  %v197 = vpop.f32.mrb[0].mxu0
  %198 = vmatprep.mubr.f32.mxu0 0.0
  %199 = vmatmul.mubr.f32.gmra.mrb[0].mxu0 %v97
  %v200 = vpop.f32.mrb[0].mxu0
  %v201 = vadd.f32 %v72, %v200
  %v202 = vpop.f32.mrb[0].mxu0
  %203 = vdwg.mxu0
  %vm204 = vcmask 162816
  %205 = vst.msk [vmem:[#allocation2] sm:$0xff] %vm204, %v166
  %206 = vst.msk [vmem:[#allocation2 + $0x8] sm:$0xff] %vm204, %v171
  %207 = vst.msk [vmem:[#allocation2 + $0x10] sm:$0xff] %vm204, %v176
  %208 = vst.msk [vmem:[#allocation2 + $0x18] sm:$0xff] %vm204, %v181
  %209 = vst.msk [vmem:[#allocation2 + $0x20] sm:$0xff] %vm204, %v186
  %210 = vst.msk [vmem:[#allocation2 + $0x28] sm:$0xff] %vm204, %v191
  %211 = vst.msk [vmem:[#allocation2 + $0x30] sm:$0xff] %vm204, %v196
  %212 = vst.msk [vmem:[#allocation2 + $0x38] sm:$0xff] %vm204, %v201
  %v213 = vld [vmem:[%s2] sm:$0xff]
  %v214 = vld [vmem:[%s2 + $0x8] sm:$0xff]
  %v215 = vld [vmem:[%s2 + $0x10] sm:$0xff]
  %v216 = vld [vmem:[%s2 + $0x18] sm:$0xff]
  %v217 = vld [vmem:[%s2 + $0x20] sm:$0xff]
  %v218 = vld [vmem:[%s2 + $0x28] sm:$0xff]
  %v219 = vld [vmem:[%s2 + $0x30] sm:$0xff]
  %v220 = vld [vmem:[%s2 + $0x38] sm:$0xff]
  %v221 = vld [vmem:[#allocation2] sm:$0xff]
  %v222 = vld [vmem:[#allocation2 + $0x8] sm:$0xff]
  %v223 = vld [vmem:[#allocation2 + $0x10] sm:$0xff]
  %v224 = vld [vmem:[#allocation2 + $0x18] sm:$0xff]
  %v225 = vld [vmem:[#allocation2 + $0x20] sm:$0xff]
  %v226 = vld [vmem:[#allocation2 + $0x28] sm:$0xff]
  %v227 = vld [vmem:[#allocation2 + $0x30] sm:$0xff]
  %v228 = vld [vmem:[#allocation2 + $0x38] sm:$0xff]
  %vm229 = vcmask 130048
  %v231 = vsel %vm229, %v213, 0
  %v234 = vsel %vm229, %v214, 0
  %v237 = vsel %vm229, %v215, 0
  %v240 = vsel %vm229, %v216, 0
  %v243 = vsel %vm229, %v217, 0
  %v246 = vsel %vm229, %v218, 0
  %v249 = vsel %vm229, %v219, 0
  %v252 = vsel %vm229, %v220, 0
  %254 = vmatprep.subr.mxu0 0.0
  %255 = vmatpush1.msra.mxu0 0.0
  %256 = vmatprep.subr.mxu0 0.0
  %257 = vmatpush1.msra.mxu0 0.0
  %258 = vmatprep.subr.mxu0 0.0
  %259 = vmatpush1.msra.mxu0 0.0
  %260 = vmatprep.subr.mxu0 0.0
  %261 = vmatpush1.msra.mxu0 0.0
  %262 = vmatprep.subr.mxu0 0.0
  %263 = vmatpush1.msra.mxu0 0.0
  %264 = vmatprep.subr.mxu0 0.0
  %265 = vmatpush1.msra.mxu0 0.0
  %266 = vmatprep.subr.mxu0 0.0
  %267 = vmatpush1.msra.mxu0 0.0
  %268 = vmatprep.subr.mxu0 0.0
  %269 = vmatpush1.msra.mxu0 0.0
  %270 = vmatprep.subr.mxu0 0.0
  %271 = vmatpush1.msra.mxu0 0.0
  %272 = vmatprep.subr.mxu0 0.0
  %273 = vmatpush1.msra.mxu0 0.0
  %274 = vmatprep.subr.mxu0 0.0
  %275 = vmatpush1.msra.mxu0 0.0
  %276 = vmatprep.subr.mxu0 0.0
  %277 = vmatpush1.msra.mxu0 0.0
  %278 = vmatprep.subr.mxu0 0.0
  %279 = vmatpush1.msra.mxu0 0.0
  %280 = vmatprep.subr.mxu0 0.0
  %281 = vmatpush1.msra.mxu0 0.0
  %282 = vmatprep.subr.mxu0 0.0
  %283 = vmatpush1.msra.mxu0 0.0
  %284 = vmatprep.subr.mxu0 0.0
  %285 = vmatpush1.msra.mxu0 0.0
  %286 = vmatprep.subr.mxu0 0.0
  %287 = vmatpush1.msra.mxu0 0.0
  %288 = vmatprep.subr.mxu0 0.0
  %289 = vmatpush1.msra.mxu0 0.0
  %290 = vmatprep.subr.mxu0 0.0
  %291 = vmatpush1.msra.mxu0 0.0
  %292 = vmatprep.subr.mxu0 0.0
  %293 = vmatpush1.msra.mxu0 0.0
  %294 = vmatprep.subr.mxu0 0.0
  %295 = vmatpush1.msra.mxu0 0.0
  %296 = vmatprep.subr.mxu0 0.0
  %297 = vmatpush1.msra.mxu0 0.0
  %298 = vmatprep.subr.mxu0 0.0
  %299 = vmatpush1.msra.mxu0 0.0
  %300 = vmatprep.subr.mxu0 0.0
  %301 = vmatpush1.msra.mxu0 0.0
  %302 = vmatprep.subr.mxu0 0.0
  %303 = vmatpush1.msra.mxu0 0.0
  %304 = vmatprep.subr.mxu0 0.0
  %305 = vmatpush1.msra.mxu0 0.0
  %306 = vmatprep.subr.mxu0 0.0
  %307 = vmatpush1.msra.mxu0 0.0
  %308 = vmatprep.subr.mxu0 0.0
  %309 = vmatpush1.msra.mxu0 0.0
  %310 = vmatprep.subr.mxu0 0.0
  %311 = vmatpush1.msra.mxu0 0.0
  %312 = vmatprep.subr.mxu0 0.0
  %313 = vmatpush1.msra.mxu0 0.0
  %314 = vmatprep.subr.mxu0 0.0
  %315 = vmatpush1.msra.mxu0 0.0
  %316 = vmatprep.subr.mxu0 0.0
  %317 = vmatpush1.msra.mxu0 0.0
  %318 = vmatprep.mubr.f32.mxu0 0.0
  %319 = vmatmul.mubr.f32.gmra.mrb[0].mxu0 %v231
  %v320 = vpop.f32.mrb[0].mxu0
  %v321 = vadd.f32 0.0, %v320
  %v322 = vpop.f32.mrb[0].mxu0
  %323 = vmatprep.mubr.f32.mxu0 0.0
  %324 = vmatmul.mubr.f32.gmra.mrb[0].mxu0 %v234
  %v325 = vpop.f32.mrb[0].mxu0
  %v326 = vadd.f32 0.0, %v325
  %v327 = vpop.f32.mrb[0].mxu0
  %328 = vmatprep.mubr.f32.mxu0 0.0
  %329 = vmatmul.mubr.f32.gmra.mrb[0].mxu0 %v237
  %v330 = vpop.f32.mrb[0].mxu0
  %v331 = vadd.f32 0.0, %v330
  %v332 = vpop.f32.mrb[0].mxu0
  %333 = vmatprep.mubr.f32.mxu0 0.0
  %334 = vmatmul.mubr.f32.gmra.mrb[0].mxu0 %v240
  %v335 = vpop.f32.mrb[0].mxu0
  %v336 = vadd.f32 0.0, %v335
  %v337 = vpop.f32.mrb[0].mxu0
  %338 = vmatprep.mubr.f32.mxu0 0.0
  %339 = vmatmul.mubr.f32.gmra.mrb[0].mxu0 %v243
  %v340 = vpop.f32.mrb[0].mxu0
  %v341 = vadd.f32 0.0, %v340
  %v342 = vpop.f32.mrb[0].mxu0
  %343 = vmatprep.mubr.f32.mxu0 0.0
  %344 = vmatmul.mubr.f32.gmra.mrb[0].mxu0 %v246
  %v345 = vpop.f32.mrb[0].mxu0
  %v346 = vadd.f32 0.0, %v345
  %v347 = vpop.f32.mrb[0].mxu0
  %348 = vmatprep.mubr.f32.mxu0 0.0
  %349 = vmatmul.mubr.f32.gmra.mrb[0].mxu0 %v249
  %v350 = vpop.f32.mrb[0].mxu0
  %v351 = vadd.f32 0.0, %v350
  %v352 = vpop.f32.mrb[0].mxu0
  %353 = vmatprep.mubr.f32.mxu0 0.0
  %354 = vmatmul.mubr.f32.gmra.mrb[0].mxu0 %v252
  %v355 = vpop.f32.mrb[0].mxu0
  %v356 = vadd.f32 0.0, %v355
  %v357 = vpop.f32.mrb[0].mxu0
  %358 = vdwg.mxu0
  %v359 = vadd.f32 %v221, %v321
  %v360 = vadd.f32 %v222, %v326
  %v361 = vadd.f32 %v223, %v331
  %v362 = vadd.f32 %v224, %v336
  %v363 = vadd.f32 %v225, %v341
  %v364 = vadd.f32 %v226, %v346
  %v365 = vadd.f32 %v227, %v351
  %v366 = vadd.f32 %v228, %v356
  %v367 = vxor.u32 %v359, 2147483648
  %v368 = vxor.u32 %v360, 2147483648
  %v369 = vxor.u32 %v361, 2147483648
  %v370 = vxor.u32 %v362, 2147483648
  %v371 = vxor.u32 %v363, 2147483648
  %v372 = vxor.u32 %v364, 2147483648
  %v373 = vmul.f32 %v367, 1.442695
  %v374 = vpow.pop %v373
  %v375 = vmul.f32 %v368, 1.442695
  %v376 = vpow.pop %v375
  %v377 = vmul.f32 %v369, 1.442695
  %v378 = vpow.pop %v377
  %v379 = vmul.f32 %v370, 1.442695
  %v380 = vpow.pop %v379
  %v381 = vmul.f32 %v371, 1.442695
  %v382 = vpow.pop %v381
  %v383 = vmul.f32 %v372, 1.442695
  %v384 = vpow.pop %v383
  %v385 = vadd.f32 %v374, 1.0
  %v386 = vadd.f32 %v376, 1.0
  %v387 = vadd.f32 %v378, 1.0
  %v388 = vadd.f32 %v380, 1.0
  %v389 = vadd.f32 %v382, 1.0
  %v390 = vadd.f32 %v384, 1.0
  %v391 = vrcp.pop %v385
  %v392 = vmul.f32 1.0, %v391
  %v393 = vrcp.pop %v386
  %v394 = vmul.f32 1.0, %v393
  %v395 = vrcp.pop %v387
  %v396 = vmul.f32 1.0, %v395
  %v397 = vrcp.pop %v388
  %v398 = vmul.f32 1.0, %v397
  %v399 = vrcp.pop %v389
  %v400 = vmul.f32 1.0, %v399
  %v401 = vrcp.pop %v390
  %v402 = vmul.f32 1.0, %v401
  %v403 = vtanh.pop %v365
  %v404 = vtanh.pop %v366
  %v405 = vmul.f32 %v396, 0.0
  %v406 = vmul.f32 %v398, 0.0
  %v407 = vmul.f32 %v392, %v403
  %v408 = vmul.f32 %v394, %v404
  %v409 = vadd.f32 %v405, %v407
  %v410 = vadd.f32 %v406, %v408
  %v411 = vtanh.pop %v409
  %v412 = vtanh.pop %v410
  %v413 = vmul.f32 %v400, %v411
  %v414 = vmul.f32 %v402, %v412
  %vm415 = vcmask 15360
  %416 = vst.msk [vmem:[%s4] sm:$0xff] %vm415, %v413
  %417 = vst.msk [vmem:[%s4 + $0x8] sm:$0xff] %vm415, %v414
  %v418 = vld [vmem:[#allocation2] sm:$0xff]
  %v419 = vld [vmem:[#allocation2 + $0x8] sm:$0xff]
  %v420 = vld [vmem:[#allocation2 + $0x10] sm:$0xff]
  %v421 = vld [vmem:[#allocation2 + $0x18] sm:$0xff]
  %v422 = vld [vmem:[#allocation2 + $0x20] sm:$0xff]
  %v423 = vld [vmem:[#allocation2 + $0x28] sm:$0xff]
  %v424 = vld [vmem:[#allocation2 + $0x30] sm:$0xff]
  %v425 = vld [vmem:[#allocation2 + $0x38] sm:$0xff]
  %426 = vmatprep.subr.mxu0 0.0
  %427 = vmatpush1.msra.mxu0 %v413
  %428 = vmatprep.subr.mxu0 0.0
  %429 = vmatpush1.msra.mxu0 %v414
  %430 = vmatprep.subr.mxu0 0.0
  %431 = vmatpush1.msra.mxu0 0.0
  %432 = vmatprep.subr.mxu0 0.0
  %433 = vmatpush1.msra.mxu0 0.0
  %434 = vmatprep.subr.mxu0 0.0
  %435 = vmatpush1.msra.mxu0 0.0
  %436 = vmatprep.subr.mxu0 0.0
  %437 = vmatpush1.msra.mxu0 0.0
  %438 = vmatprep.subr.mxu0 0.0
  %439 = vmatpush1.msra.mxu0 0.0
  %440 = vmatprep.subr.mxu0 0.0
  %441 = vmatpush1.msra.mxu0 0.0
  %442 = vmatprep.subr.mxu0 0.0
  %443 = vmatpush1.msra.mxu0 0.0
  %444 = vmatprep.subr.mxu0 0.0
  %445 = vmatpush1.msra.mxu0 0.0
  %446 = vmatprep.subr.mxu0 0.0
  %447 = vmatpush1.msra.mxu0 0.0
  %448 = vmatprep.subr.mxu0 0.0
  %449 = vmatpush1.msra.mxu0 0.0
  %450 = vmatprep.subr.mxu0 0.0
  %451 = vmatpush1.msra.mxu0 0.0
  %452 = vmatprep.subr.mxu0 0.0
  %453 = vmatpush1.msra.mxu0 0.0
  %454 = vmatprep.subr.mxu0 0.0
  %455 = vmatpush1.msra.mxu0 0.0
  %456 = vmatprep.subr.mxu0 0.0
  %457 = vmatpush1.msra.mxu0 0.0
  %458 = vmatprep.subr.mxu0 0.0
  %459 = vmatpush1.msra.mxu0 0.0
  %460 = vmatprep.subr.mxu0 0.0
  %461 = vmatpush1.msra.mxu0 0.0
  %462 = vmatprep.subr.mxu0 0.0
  %463 = vmatpush1.msra.mxu0 0.0
  %464 = vmatprep.subr.mxu0 0.0
  %465 = vmatpush1.msra.mxu0 0.0
  %466 = vmatprep.subr.mxu0 0.0
  %467 = vmatpush1.msra.mxu0 0.0
  %468 = vmatprep.subr.mxu0 0.0
  %469 = vmatpush1.msra.mxu0 0.0
  %470 = vmatprep.subr.mxu0 0.0
  %471 = vmatpush1.msra.mxu0 0.0
  %472 = vmatprep.subr.mxu0 0.0
  %473 = vmatpush1.msra.mxu0 0.0
  %474 = vmatprep.subr.mxu0 0.0
  %475 = vmatpush1.msra.mxu0 0.0
  %476 = vmatprep.subr.mxu0 0.0
  %477 = vmatpush1.msra.mxu0 0.0
  %478 = vmatprep.subr.mxu0 0.0
  %479 = vmatpush1.msra.mxu0 0.0
  %480 = vmatprep.subr.mxu0 0.0
  %481 = vmatpush1.msra.mxu0 0.0
  %482 = vmatprep.subr.mxu0 0.0
  %483 = vmatpush1.msra.mxu0 0.0
  %484 = vmatprep.subr.mxu0 0.0
  %485 = vmatpush1.msra.mxu0 0.0
  %486 = vmatprep.subr.mxu0 0.0
  %487 = vmatpush1.msra.mxu0 0.0
  %488 = vmatprep.subr.mxu0 0.0
  %489 = vmatpush1.msra.mxu0 0.0
  %490 = vmatprep.mubr.f32.mxu0 0.0
  %491 = vmatmul.mubr.f32.gmra.mrb[0].mxu0 %v231
  %v492 = vpop.f32.mrb[0].mxu0
  %v493 = vadd.f32 0.0, %v492
  %v494 = vpop.f32.mrb[0].mxu0
  %495 = vmatprep.mubr.f32.mxu0 0.0
  %496 = vmatmul.mubr.f32.gmra.mrb[0].mxu0 %v234
  %v497 = vpop.f32.mrb[0].mxu0
  %v498 = vadd.f32 0.0, %v497
  %v499 = vpop.f32.mrb[0].mxu0
  %500 = vmatprep.mubr.f32.mxu0 0.0
  %501 = vmatmul.mubr.f32.gmra.mrb[0].mxu0 %v237
  %v502 = vpop.f32.mrb[0].mxu0
  %v503 = vadd.f32 0.0, %v502
  %v504 = vpop.f32.mrb[0].mxu0
  %505 = vmatprep.mubr.f32.mxu0 0.0
  %506 = vmatmul.mubr.f32.gmra.mrb[0].mxu0 %v240
  %v507 = vpop.f32.mrb[0].mxu0
  %v508 = vadd.f32 0.0, %v507
  %v509 = vpop.f32.mrb[0].mxu0
  %510 = vmatprep.mubr.f32.mxu0 0.0
  %511 = vmatmul.mubr.f32.gmra.mrb[0].mxu0 %v243
  %v512 = vpop.f32.mrb[0].mxu0
  %v513 = vadd.f32 0.0, %v512
  %v514 = vpop.f32.mrb[0].mxu0
  %515 = vmatprep.mubr.f32.mxu0 0.0
  %516 = vmatmul.mubr.f32.gmra.mrb[0].mxu0 %v246
  %v517 = vpop.f32.mrb[0].mxu0
  %v518 = vadd.f32 0.0, %v517
  %v519 = vpop.f32.mrb[0].mxu0
  %520 = vmatprep.mubr.f32.mxu0 0.0
  %521 = vmatmul.mubr.f32.gmra.mrb[0].mxu0 %v249
  %v522 = vpop.f32.mrb[0].mxu0
  %v523 = vadd.f32 0.0, %v522
  %v524 = vpop.f32.mrb[0].mxu0
  %525 = vmatprep.mubr.f32.mxu0 0.0
  %526 = vmatmul.mubr.f32.gmra.mrb[0].mxu0 %v252
  %v527 = vpop.f32.mrb[0].mxu0
  %v528 = vadd.f32 0.0, %v527
  %v529 = vpop.f32.mrb[0].mxu0
  %530 = vdwg.mxu0
  %539 = vrot.lane.b32.xlu0 %v493, 2
  %v540 = vpop.permute.xlu0 %539
  %541 = vrot.lane.b32.xlu0 %v498, 2
  %v542 = vpop.permute.xlu0 %541
  %543 = vrot.lane.b32.xlu0 %v503, 2
  %v544 = vpop.permute.xlu0 %543
  %545 = vrot.lane.b32.xlu0 %v508, 2
  %v546 = vpop.permute.xlu0 %545
  %547 = vrot.lane.b32.xlu0 %v513, 2
  %v548 = vpop.permute.xlu0 %547
  %549 = vrot.lane.b32.xlu0 %v518, 2
  %v550 = vpop.permute.xlu0 %549
  %551 = vrot.lane.b32.xlu0 %v523, 2
  %v552 = vpop.permute.xlu0 %551
  %553 = vrot.lane.b32.xlu0 %v528, 2
  %v554 = vpop.permute.xlu0 %553
  %v563 = vadd.f32 %v418, %v540
  %v564 = vadd.f32 %v419, %v542
  %v565 = vadd.f32 %v420, %v544
  %v566 = vadd.f32 %v421, %v546
  %v567 = vadd.f32 %v422, %v548
  %v568 = vadd.f32 %v423, %v550
  %v569 = vadd.f32 %v424, %v552
  %v570 = vadd.f32 %v425, %v554
  %v571 = vxor.u32 %v563, 2147483648
  %v572 = vxor.u32 %v564, 2147483648
  %v573 = vxor.u32 %v565, 2147483648
  %v574 = vxor.u32 %v566, 2147483648
  %v575 = vxor.u32 %v567, 2147483648
  %v576 = vxor.u32 %v568, 2147483648
  %v577 = vmul.f32 %v571, 1.442695
  %v578 = vpow.pop %v577
  %v579 = vmul.f32 %v572, 1.442695
  %v580 = vpow.pop %v579
  %v581 = vmul.f32 %v573, 1.442695
  %v582 = vpow.pop %v581
  %v583 = vmul.f32 %v574, 1.442695
  %v584 = vpow.pop %v583
  %v585 = vmul.f32 %v575, 1.442695
  %v586 = vpow.pop %v585
  %v587 = vmul.f32 %v576, 1.442695
  %v588 = vpow.pop %v587
  %v589 = vadd.f32 %v578, 1.0
  %v590 = vadd.f32 %v580, 1.0
  %v591 = vadd.f32 %v582, 1.0
  %v592 = vadd.f32 %v584, 1.0
  %v593 = vadd.f32 %v586, 1.0
  %v594 = vadd.f32 %v588, 1.0
  %v595 = vrcp.pop %v589
  %v596 = vmul.f32 1.0, %v595
  %v597 = vrcp.pop %v590
  %v598 = vmul.f32 1.0, %v597
  %v599 = vrcp.pop %v591
  %v600 = vmul.f32 1.0, %v599
  %v601 = vrcp.pop %v592
  %v602 = vmul.f32 1.0, %v601
  %v603 = vrcp.pop %v593
  %v604 = vmul.f32 1.0, %v603
  %v605 = vrcp.pop %v594
  %v606 = vmul.f32 1.0, %v605
  %v607 = vtanh.pop %v569
  %v608 = vtanh.pop %v570
  %611 = vrot.lane.b32.xlu0 %v409, 2
  %v612 = vpop.permute.xlu0 %611
  %613 = vrot.lane.b32.xlu0 %v410, 2
  %v614 = vpop.permute.xlu0 %613
  %v617 = vmul.f32 %v600, %v612
  %v618 = vmul.f32 %v602, %v614
  %v619 = vmul.f32 %v596, %v607
  %v620 = vmul.f32 %v598, %v608
  %v621 = vadd.f32 %v617, %v619
  %v622 = vadd.f32 %v618, %v620
  %v623 = vtanh.pop %v621
  %v624 = vtanh.pop %v622
  %v625 = vmul.f32 %v604, %v623
  %v626 = vmul.f32 %v606, %v624
  %629 = vrot.lane.b32.xlu0 %v625, 126
  %v630 = vpop.permute.xlu0 %629
  %631 = vrot.lane.b32.xlu0 %v626, 126
  %v632 = vpop.permute.xlu0 %631
  %s635 = scalar_lea.vmem %s4, 16
  %636 = vst.msk [vmem:[%s635] sm:$0xff] %vm415, %v630
  %637 = vst.msk [vmem:[%s635 + $0x8] sm:$0xff] %vm415, %v632
  %v638 = vld [vmem:[#allocation2] sm:$0xff]
  %v639 = vld [vmem:[#allocation2 + $0x8] sm:$0xff]
  %v640 = vld [vmem:[#allocation2 + $0x10] sm:$0xff]
  %v641 = vld [vmem:[#allocation2 + $0x18] sm:$0xff]
  %v642 = vld [vmem:[#allocation2 + $0x20] sm:$0xff]
  %v643 = vld [vmem:[#allocation2 + $0x28] sm:$0xff]
  %v644 = vld [vmem:[#allocation2 + $0x30] sm:$0xff]
  %v645 = vld [vmem:[#allocation2 + $0x38] sm:$0xff]
  %646 = vmatprep.subr.mxu0 0.0
  %647 = vmatpush1.msra.mxu0 %v630
  %648 = vmatprep.subr.mxu0 0.0
  %649 = vmatpush1.msra.mxu0 %v632
  %650 = vmatprep.subr.mxu0 0.0
  %651 = vmatpush1.msra.mxu0 0.0
  %652 = vmatprep.subr.mxu0 0.0
  %653 = vmatpush1.msra.mxu0 0.0
  %654 = vmatprep.subr.mxu0 0.0
  %655 = vmatpush1.msra.mxu0 0.0
  %656 = vmatprep.subr.mxu0 0.0
  %657 = vmatpush1.msra.mxu0 0.0
  %658 = vmatprep.subr.mxu0 0.0
  %659 = vmatpush1.msra.mxu0 0.0
  %660 = vmatprep.subr.mxu0 0.0
  %661 = vmatpush1.msra.mxu0 0.0
  %662 = vmatprep.subr.mxu0 0.0
  %663 = vmatpush1.msra.mxu0 0.0
  %664 = vmatprep.subr.mxu0 0.0
  %665 = vmatpush1.msra.mxu0 0.0
  %666 = vmatprep.subr.mxu0 0.0
  %667 = vmatpush1.msra.mxu0 0.0
  %668 = vmatprep.subr.mxu0 0.0
  %669 = vmatpush1.msra.mxu0 0.0
  %670 = vmatprep.subr.mxu0 0.0
  %671 = vmatpush1.msra.mxu0 0.0
  %672 = vmatprep.subr.mxu0 0.0
  %673 = vmatpush1.msra.mxu0 0.0
  %674 = vmatprep.subr.mxu0 0.0
  %675 = vmatpush1.msra.mxu0 0.0
  %676 = vmatprep.subr.mxu0 0.0
  %677 = vmatpush1.msra.mxu0 0.0
  %678 = vmatprep.subr.mxu0 0.0
  %679 = vmatpush1.msra.mxu0 0.0
  %680 = vmatprep.subr.mxu0 0.0
  %681 = vmatpush1.msra.mxu0 0.0
  %682 = vmatprep.subr.mxu0 0.0
  %683 = vmatpush1.msra.mxu0 0.0
  %684 = vmatprep.subr.mxu0 0.0
  %685 = vmatpush1.msra.mxu0 0.0
  %686 = vmatprep.subr.mxu0 0.0
  %687 = vmatpush1.msra.mxu0 0.0
  %688 = vmatprep.subr.mxu0 0.0
  %689 = vmatpush1.msra.mxu0 0.0
  %690 = vmatprep.subr.mxu0 0.0
  %691 = vmatpush1.msra.mxu0 0.0
  %692 = vmatprep.subr.mxu0 0.0
  %693 = vmatpush1.msra.mxu0 0.0
  %694 = vmatprep.subr.mxu0 0.0
  %695 = vmatpush1.msra.mxu0 0.0
  %696 = vmatprep.subr.mxu0 0.0
  %697 = vmatpush1.msra.mxu0 0.0
  %698 = vmatprep.subr.mxu0 0.0
  %699 = vmatpush1.msra.mxu0 0.0
  %700 = vmatprep.subr.mxu0 0.0
  %701 = vmatpush1.msra.mxu0 0.0
  %702 = vmatprep.subr.mxu0 0.0
  %703 = vmatpush1.msra.mxu0 0.0
  %704 = vmatprep.subr.mxu0 0.0
  %705 = vmatpush1.msra.mxu0 0.0
  %706 = vmatprep.subr.mxu0 0.0
  %707 = vmatpush1.msra.mxu0 0.0
  %708 = vmatprep.subr.mxu0 0.0
  %709 = vmatpush1.msra.mxu0 0.0
  %710 = vmatprep.mubr.f32.mxu0 0.0
  %711 = vmatmul.mubr.f32.gmra.mrb[0].mxu0 %v231
  %v712 = vpop.f32.mrb[0].mxu0
  %v713 = vadd.f32 0.0, %v712
  %v714 = vpop.f32.mrb[0].mxu0
  %715 = vmatprep.mubr.f32.mxu0 0.0
  %716 = vmatmul.mubr.f32.gmra.mrb[0].mxu0 %v234
  %v717 = vpop.f32.mrb[0].mxu0
  %v718 = vadd.f32 0.0, %v717
  %v719 = vpop.f32.mrb[0].mxu0
  %720 = vmatprep.mubr.f32.mxu0 0.0
  %721 = vmatmul.mubr.f32.gmra.mrb[0].mxu0 %v237
  %v722 = vpop.f32.mrb[0].mxu0
  %v723 = vadd.f32 0.0, %v722
  %v724 = vpop.f32.mrb[0].mxu0
  %725 = vmatprep.mubr.f32.mxu0 0.0
  %726 = vmatmul.mubr.f32.gmra.mrb[0].mxu0 %v240
  %v727 = vpop.f32.mrb[0].mxu0
  %v728 = vadd.f32 0.0, %v727
  %v729 = vpop.f32.mrb[0].mxu0
  %730 = vmatprep.mubr.f32.mxu0 0.0
  %731 = vmatmul.mubr.f32.gmra.mrb[0].mxu0 %v243
  %v732 = vpop.f32.mrb[0].mxu0
  %v733 = vadd.f32 0.0, %v732
  %v734 = vpop.f32.mrb[0].mxu0
  %735 = vmatprep.mubr.f32.mxu0 0.0
  %736 = vmatmul.mubr.f32.gmra.mrb[0].mxu0 %v246
  %v737 = vpop.f32.mrb[0].mxu0
  %v738 = vadd.f32 0.0, %v737
  %v739 = vpop.f32.mrb[0].mxu0
  %740 = vmatprep.mubr.f32.mxu0 0.0
  %741 = vmatmul.mubr.f32.gmra.mrb[0].mxu0 %v249
  %v742 = vpop.f32.mrb[0].mxu0
  %v743 = vadd.f32 0.0, %v742
  %v744 = vpop.f32.mrb[0].mxu0
  %745 = vmatprep.mubr.f32.mxu0 0.0
  %746 = vmatmul.mubr.f32.gmra.mrb[0].mxu0 %v252
  %v747 = vpop.f32.mrb[0].mxu0
  %v748 = vadd.f32 0.0, %v747
  %v749 = vpop.f32.mrb[0].mxu0
  %750 = vdwg.mxu0
  %759 = vrot.lane.b32.xlu0 %v713, 4
  %v760 = vpop.permute.xlu0 %759
  %761 = vrot.lane.b32.xlu0 %v718, 4
  %v762 = vpop.permute.xlu0 %761
  %763 = vrot.lane.b32.xlu0 %v723, 4
  %v764 = vpop.permute.xlu0 %763
  %765 = vrot.lane.b32.xlu0 %v728, 4
  %v766 = vpop.permute.xlu0 %765
  %767 = vrot.lane.b32.xlu0 %v733, 4
  %v768 = vpop.permute.xlu0 %767
  %769 = vrot.lane.b32.xlu0 %v738, 4
  %v770 = vpop.permute.xlu0 %769
  %771 = vrot.lane.b32.xlu0 %v743, 4
  %v772 = vpop.permute.xlu0 %771
  %773 = vrot.lane.b32.xlu0 %v748, 4
  %v774 = vpop.permute.xlu0 %773
  %v783 = vadd.f32 %v638, %v760
  %v784 = vadd.f32 %v639, %v762
  %v785 = vadd.f32 %v640, %v764
  %v786 = vadd.f32 %v641, %v766
  %v787 = vadd.f32 %v642, %v768
  %v788 = vadd.f32 %v643, %v770
  %v789 = vadd.f32 %v644, %v772
  %v790 = vadd.f32 %v645, %v774
  %v791 = vxor.u32 %v783, 2147483648
  %v792 = vxor.u32 %v784, 2147483648
  %v793 = vxor.u32 %v785, 2147483648
  %v794 = vxor.u32 %v786, 2147483648
  %v795 = vxor.u32 %v787, 2147483648
  %v796 = vxor.u32 %v788, 2147483648
  %v797 = vmul.f32 %v791, 1.442695
  %v798 = vpow.pop %v797
  %v799 = vmul.f32 %v792, 1.442695
  %v800 = vpow.pop %v799
  %v801 = vmul.f32 %v793, 1.442695
  %v802 = vpow.pop %v801
  %v803 = vmul.f32 %v794, 1.442695
  %v804 = vpow.pop %v803
  %v805 = vmul.f32 %v795, 1.442695
  %v806 = vpow.pop %v805
  %v807 = vmul.f32 %v796, 1.442695
  %v808 = vpow.pop %v807
  %v809 = vadd.f32 %v798, 1.0
  %v810 = vadd.f32 %v800, 1.0
  %v811 = vadd.f32 %v802, 1.0
  %v812 = vadd.f32 %v804, 1.0
  %v813 = vadd.f32 %v806, 1.0
  %v814 = vadd.f32 %v808, 1.0
  %v815 = vrcp.pop %v809
  %v816 = vmul.f32 1.0, %v815
  %v817 = vrcp.pop %v810
  %v818 = vmul.f32 1.0, %v817
  %v819 = vrcp.pop %v811
  %v820 = vmul.f32 1.0, %v819
  %v821 = vrcp.pop %v812
  %v822 = vmul.f32 1.0, %v821
  %v823 = vrcp.pop %v813
  %v824 = vmul.f32 1.0, %v823
  %v825 = vrcp.pop %v814
  %v826 = vmul.f32 1.0, %v825
  %v827 = vtanh.pop %v789
  %v828 = vtanh.pop %v790
  %831 = vrot.lane.b32.xlu0 %v621, 2
  %v832 = vpop.permute.xlu0 %831
  %833 = vrot.lane.b32.xlu0 %v622, 2
  %v834 = vpop.permute.xlu0 %833
  %v837 = vmul.f32 %v820, %v832
  %v838 = vmul.f32 %v822, %v834
  %v839 = vmul.f32 %v816, %v827
  %v840 = vmul.f32 %v818, %v828
  %v841 = vadd.f32 %v837, %v839
  %v842 = vadd.f32 %v838, %v840
  %v843 = vtanh.pop %v841
  %v844 = vtanh.pop %v842
  %v845 = vmul.f32 %v824, %v843
  %v846 = vmul.f32 %v826, %v844
  %849 = vrot.lane.b32.xlu0 %v845, 124
  %v850 = vpop.permute.xlu0 %849
  %851 = vrot.lane.b32.xlu0 %v846, 124
  %v852 = vpop.permute.xlu0 %851
  %s855 = scalar_lea.vmem %s4, 32
  %856 = vst.msk [vmem:[%s855] sm:$0xff] %vm415, %v850
  %857 = vst.msk [vmem:[%s855 + $0x8] sm:$0xff] %vm415, %v852
  %v858 = vld [vmem:[#allocation2] sm:$0xff]
  %v859 = vld [vmem:[#allocation2 + $0x8] sm:$0xff]
  %v860 = vld [vmem:[#allocation2 + $0x10] sm:$0xff]
  %v861 = vld [vmem:[#allocation2 + $0x18] sm:$0xff]
  %v862 = vld [vmem:[#allocation2 + $0x20] sm:$0xff]
  %v863 = vld [vmem:[#allocation2 + $0x28] sm:$0xff]
  %v864 = vld [vmem:[#allocation2 + $0x30] sm:$0xff]
  %v865 = vld [vmem:[#allocation2 + $0x38] sm:$0xff]
  %866 = vmatprep.subr.mxu0 0.0
  %867 = vmatpush1.msra.mxu0 %v850
  %868 = vmatprep.subr.mxu0 0.0
  %869 = vmatpush1.msra.mxu0 %v852
  %870 = vmatprep.subr.mxu0 0.0
  %871 = vmatpush1.msra.mxu0 0.0
  %872 = vmatprep.subr.mxu0 0.0
  %873 = vmatpush1.msra.mxu0 0.0
  %874 = vmatprep.subr.mxu0 0.0
  %875 = vmatpush1.msra.mxu0 0.0
  %876 = vmatprep.subr.mxu0 0.0
  %877 = vmatpush1.msra.mxu0 0.0
  %878 = vmatprep.subr.mxu0 0.0
  %879 = vmatpush1.msra.mxu0 0.0
  %880 = vmatprep.subr.mxu0 0.0
  %881 = vmatpush1.msra.mxu0 0.0
  %882 = vmatprep.subr.mxu0 0.0
  %883 = vmatpush1.msra.mxu0 0.0
  %884 = vmatprep.subr.mxu0 0.0
  %885 = vmatpush1.msra.mxu0 0.0
  %886 = vmatprep.subr.mxu0 0.0
  %887 = vmatpush1.msra.mxu0 0.0
  %888 = vmatprep.subr.mxu0 0.0
  %889 = vmatpush1.msra.mxu0 0.0
  %890 = vmatprep.subr.mxu0 0.0
  %891 = vmatpush1.msra.mxu0 0.0
  %892 = vmatprep.subr.mxu0 0.0
  %893 = vmatpush1.msra.mxu0 0.0
  %894 = vmatprep.subr.mxu0 0.0
  %895 = vmatpush1.msra.mxu0 0.0
  %896 = vmatprep.subr.mxu0 0.0
  %897 = vmatpush1.msra.mxu0 0.0
  %898 = vmatprep.subr.mxu0 0.0
  %899 = vmatpush1.msra.mxu0 0.0
  %900 = vmatprep.subr.mxu0 0.0
  %901 = vmatpush1.msra.mxu0 0.0
  %902 = vmatprep.subr.mxu0 0.0
  %903 = vmatpush1.msra.mxu0 0.0
  %904 = vmatprep.subr.mxu0 0.0
  %905 = vmatpush1.msra.mxu0 0.0
  %906 = vmatprep.subr.mxu0 0.0
  %907 = vmatpush1.msra.mxu0 0.0
  %908 = vmatprep.subr.mxu0 0.0
  %909 = vmatpush1.msra.mxu0 0.0
  %910 = vmatprep.subr.mxu0 0.0
  %911 = vmatpush1.msra.mxu0 0.0
  %912 = vmatprep.subr.mxu0 0.0
  %913 = vmatpush1.msra.mxu0 0.0
  %914 = vmatprep.subr.mxu0 0.0
  %915 = vmatpush1.msra.mxu0 0.0
  %916 = vmatprep.subr.mxu0 0.0
  %917 = vmatpush1.msra.mxu0 0.0
  %918 = vmatprep.subr.mxu0 0.0
  %919 = vmatpush1.msra.mxu0 0.0
  %920 = vmatprep.subr.mxu0 0.0
  %921 = vmatpush1.msra.mxu0 0.0
  %922 = vmatprep.subr.mxu0 0.0
  %923 = vmatpush1.msra.mxu0 0.0
  %924 = vmatprep.subr.mxu0 0.0
  %925 = vmatpush1.msra.mxu0 0.0
  %926 = vmatprep.subr.mxu0 0.0
  %927 = vmatpush1.msra.mxu0 0.0
  %928 = vmatprep.subr.mxu0 0.0
  %929 = vmatpush1.msra.mxu0 0.0
  %930 = vmatprep.mubr.f32.mxu0 0.0
  %931 = vmatmul.mubr.f32.gmra.mrb[0].mxu0 %v231
  %v932 = vpop.f32.mrb[0].mxu0
  %v933 = vadd.f32 0.0, %v932
  %v934 = vpop.f32.mrb[0].mxu0
  %935 = vmatprep.mubr.f32.mxu0 0.0
  %936 = vmatmul.mubr.f32.gmra.mrb[0].mxu0 %v234
  %v937 = vpop.f32.mrb[0].mxu0
  %v938 = vadd.f32 0.0, %v937
  %v939 = vpop.f32.mrb[0].mxu0
  %940 = vmatprep.mubr.f32.mxu0 0.0
  %941 = vmatmul.mubr.f32.gmra.mrb[0].mxu0 %v237
  %v942 = vpop.f32.mrb[0].mxu0
  %v943 = vadd.f32 0.0, %v942
  %v944 = vpop.f32.mrb[0].mxu0
  %945 = vmatprep.mubr.f32.mxu0 0.0
  %946 = vmatmul.mubr.f32.gmra.mrb[0].mxu0 %v240
  %v947 = vpop.f32.mrb[0].mxu0
  %v948 = vadd.f32 0.0, %v947
  %v949 = vpop.f32.mrb[0].mxu0
  %950 = vmatprep.mubr.f32.mxu0 0.0
  %951 = vmatmul.mubr.f32.gmra.mrb[0].mxu0 %v243
  %v952 = vpop.f32.mrb[0].mxu0
  %v953 = vadd.f32 0.0, %v952
  %v954 = vpop.f32.mrb[0].mxu0
  %955 = vmatprep.mubr.f32.mxu0 0.0
  %956 = vmatmul.mubr.f32.gmra.mrb[0].mxu0 %v246
  %v957 = vpop.f32.mrb[0].mxu0
  %v958 = vadd.f32 0.0, %v957
  %v959 = vpop.f32.mrb[0].mxu0
  %960 = vmatprep.mubr.f32.mxu0 0.0
  %961 = vmatmul.mubr.f32.gmra.mrb[0].mxu0 %v249
  %v962 = vpop.f32.mrb[0].mxu0
  %v963 = vadd.f32 0.0, %v962
  %v964 = vpop.f32.mrb[0].mxu0
  %965 = vmatprep.mubr.f32.mxu0 0.0
  %966 = vmatmul.mubr.f32.gmra.mrb[0].mxu0 %v252
  %v967 = vpop.f32.mrb[0].mxu0
  %v968 = vadd.f32 0.0, %v967
  %v969 = vpop.f32.mrb[0].mxu0
  %970 = vdwg.mxu0
  %979 = vrot.lane.b32.xlu0 %v933, 6
  %v980 = vpop.permute.xlu0 %979
  %981 = vrot.lane.b32.xlu0 %v938, 6
  %v982 = vpop.permute.xlu0 %981
  %983 = vrot.lane.b32.xlu0 %v943, 6
  %v984 = vpop.permute.xlu0 %983
  %985 = vrot.lane.b32.xlu0 %v948, 6
  %v986 = vpop.permute.xlu0 %985
  %987 = vrot.lane.b32.xlu0 %v953, 6
  %v988 = vpop.permute.xlu0 %987
  %989 = vrot.lane.b32.xlu0 %v958, 6
  %v990 = vpop.permute.xlu0 %989
  %991 = vrot.lane.b32.xlu0 %v963, 6
  %v992 = vpop.permute.xlu0 %991
  %993 = vrot.lane.b32.xlu0 %v968, 6
  %v994 = vpop.permute.xlu0 %993
  %v1003 = vadd.f32 %v858, %v980
  %v1004 = vadd.f32 %v859, %v982
  %v1005 = vadd.f32 %v860, %v984
  %v1006 = vadd.f32 %v861, %v986
  %v1007 = vadd.f32 %v862, %v988
  %v1008 = vadd.f32 %v863, %v990
  %v1009 = vadd.f32 %v864, %v992
  %v1010 = vadd.f32 %v865, %v994
  %v1011 = vxor.u32 %v1003, 2147483648
  %v1012 = vxor.u32 %v1004, 2147483648
  %v1013 = vxor.u32 %v1005, 2147483648
  %v1014 = vxor.u32 %v1006, 2147483648
  %v1015 = vxor.u32 %v1007, 2147483648
  %v1016 = vxor.u32 %v1008, 2147483648
  %v1017 = vmul.f32 %v1011, 1.442695
  %v1018 = vpow.pop %v1017
  %v1019 = vmul.f32 %v1012, 1.442695
  %v1020 = vpow.pop %v1019
  %v1021 = vmul.f32 %v1013, 1.442695
  %v1022 = vpow.pop %v1021
  %v1023 = vmul.f32 %v1014, 1.442695
  %v1024 = vpow.pop %v1023
  %v1025 = vmul.f32 %v1015, 1.442695
  %v1026 = vpow.pop %v1025
  %v1027 = vmul.f32 %v1016, 1.442695
  %v1028 = vpow.pop %v1027
  %v1029 = vadd.f32 %v1018, 1.0
  %v1030 = vadd.f32 %v1020, 1.0
  %v1031 = vadd.f32 %v1022, 1.0
  %v1032 = vadd.f32 %v1024, 1.0
  %v1033 = vadd.f32 %v1026, 1.0
  %v1034 = vadd.f32 %v1028, 1.0
  %v1035 = vrcp.pop %v1029
  %v1036 = vmul.f32 1.0, %v1035
  %v1037 = vrcp.pop %v1030
  %v1038 = vmul.f32 1.0, %v1037
  %v1039 = vrcp.pop %v1031
  %v1040 = vmul.f32 1.0, %v1039
  %v1041 = vrcp.pop %v1032
  %v1042 = vmul.f32 1.0, %v1041
  %v1043 = vrcp.pop %v1033
  %v1044 = vmul.f32 1.0, %v1043
  %v1045 = vrcp.pop %v1034
  %v1046 = vmul.f32 1.0, %v1045
  %v1047 = vtanh.pop %v1009
  %v1048 = vtanh.pop %v1010
  %1051 = vrot.lane.b32.xlu0 %v841, 2
  %v1052 = vpop.permute.xlu0 %1051
  %1053 = vrot.lane.b32.xlu0 %v842, 2
  %v1054 = vpop.permute.xlu0 %1053
  %v1057 = vmul.f32 %v1040, %v1052
  %v1058 = vmul.f32 %v1042, %v1054
  %v1059 = vmul.f32 %v1036, %v1047
  %v1060 = vmul.f32 %v1038, %v1048
  %v1061 = vadd.f32 %v1057, %v1059
  %v1062 = vadd.f32 %v1058, %v1060
  %v1063 = vtanh.pop %v1061
  %v1064 = vtanh.pop %v1062
  %v1065 = vmul.f32 %v1044, %v1063
  %v1066 = vmul.f32 %v1046, %v1064
  %1069 = vrot.lane.b32.xlu0 %v1065, 122
  %v1070 = vpop.permute.xlu0 %1069
  %1071 = vrot.lane.b32.xlu0 %v1066, 122
  %v1072 = vpop.permute.xlu0 %1071
  %s1075 = scalar_lea.vmem %s4, 48
  %1076 = vst.msk [vmem:[%s1075] sm:$0xff] %vm415, %v1070
  %1077 = vst.msk [vmem:[%s1075 + $0x8] sm:$0xff] %vm415, %v1072
  %v1078 = vld [vmem:[#allocation2] sm:$0xff]
  %v1079 = vld [vmem:[#allocation2 + $0x8] sm:$0xff]
  %v1080 = vld [vmem:[#allocation2 + $0x10] sm:$0xff]
  %v1081 = vld [vmem:[#allocation2 + $0x18] sm:$0xff]
  %v1082 = vld [vmem:[#allocation2 + $0x20] sm:$0xff]
  %v1083 = vld [vmem:[#allocation2 + $0x28] sm:$0xff]
  %v1084 = vld [vmem:[#allocation2 + $0x30] sm:$0xff]
  %v1085 = vld [vmem:[#allocation2 + $0x38] sm:$0xff]
  %1086 = vmatprep.subr.mxu0 0.0
  %1087 = vmatpush1.msra.mxu0 %v1070
  %1088 = vmatprep.subr.mxu0 0.0
  %1089 = vmatpush1.msra.mxu0 %v1072
  %1090 = vmatprep.subr.mxu0 0.0
  %1091 = vmatpush1.msra.mxu0 0.0
  %1092 = vmatprep.subr.mxu0 0.0
  %1093 = vmatpush1.msra.mxu0 0.0
  %1094 = vmatprep.subr.mxu0 0.0
  %1095 = vmatpush1.msra.mxu0 0.0
  %1096 = vmatprep.subr.mxu0 0.0
  %1097 = vmatpush1.msra.mxu0 0.0
  %1098 = vmatprep.subr.mxu0 0.0
  %1099 = vmatpush1.msra.mxu0 0.0
  %1100 = vmatprep.subr.mxu0 0.0
  %1101 = vmatpush1.msra.mxu0 0.0
  %1102 = vmatprep.subr.mxu0 0.0
  %1103 = vmatpush1.msra.mxu0 0.0
  %1104 = vmatprep.subr.mxu0 0.0
  %1105 = vmatpush1.msra.mxu0 0.0
  %1106 = vmatprep.subr.mxu0 0.0
  %1107 = vmatpush1.msra.mxu0 0.0
  %1108 = vmatprep.subr.mxu0 0.0
  %1109 = vmatpush1.msra.mxu0 0.0
  %1110 = vmatprep.subr.mxu0 0.0
  %1111 = vmatpush1.msra.mxu0 0.0
  %1112 = vmatprep.subr.mxu0 0.0
  %1113 = vmatpush1.msra.mxu0 0.0
  %1114 = vmatprep.subr.mxu0 0.0
  %1115 = vmatpush1.msra.mxu0 0.0
  %1116 = vmatprep.subr.mxu0 0.0
  %1117 = vmatpush1.msra.mxu0 0.0
  %1118 = vmatprep.subr.mxu0 0.0
  %1119 = vmatpush1.msra.mxu0 0.0
  %1120 = vmatprep.subr.mxu0 0.0
  %1121 = vmatpush1.msra.mxu0 0.0
  %1122 = vmatprep.subr.mxu0 0.0
  %1123 = vmatpush1.msra.mxu0 0.0
  %1124 = vmatprep.subr.mxu0 0.0
  %1125 = vmatpush1.msra.mxu0 0.0
  %1126 = vmatprep.subr.mxu0 0.0
  %1127 = vmatpush1.msra.mxu0 0.0
  %1128 = vmatprep.subr.mxu0 0.0
  %1129 = vmatpush1.msra.mxu0 0.0
  %1130 = vmatprep.subr.mxu0 0.0
  %1131 = vmatpush1.msra.mxu0 0.0
  %1132 = vmatprep.subr.mxu0 0.0
  %1133 = vmatpush1.msra.mxu0 0.0
  %1134 = vmatprep.subr.mxu0 0.0
  %1135 = vmatpush1.msra.mxu0 0.0
  %1136 = vmatprep.subr.mxu0 0.0
  %1137 = vmatpush1.msra.mxu0 0.0
  %1138 = vmatprep.subr.mxu0 0.0
  %1139 = vmatpush1.msra.mxu0 0.0
  %1140 = vmatprep.subr.mxu0 0.0
  %1141 = vmatpush1.msra.mxu0 0.0
  %1142 = vmatprep.subr.mxu0 0.0
  %1143 = vmatpush1.msra.mxu0 0.0
  %1144 = vmatprep.subr.mxu0 0.0
  %1145 = vmatpush1.msra.mxu0 0.0
  %1146 = vmatprep.subr.mxu0 0.0
  %1147 = vmatpush1.msra.mxu0 0.0
  %1148 = vmatprep.subr.mxu0 0.0
  %1149 = vmatpush1.msra.mxu0 0.0
  %1150 = vmatprep.mubr.f32.mxu0 0.0
  %1151 = vmatmul.mubr.f32.gmra.mrb[0].mxu0 %v231
  %v1152 = vpop.f32.mrb[0].mxu0
  %v1153 = vadd.f32 0.0, %v1152
  %v1154 = vpop.f32.mrb[0].mxu0
  %1155 = vmatprep.mubr.f32.mxu0 0.0
  %1156 = vmatmul.mubr.f32.gmra.mrb[0].mxu0 %v234
  %v1157 = vpop.f32.mrb[0].mxu0
  %v1158 = vadd.f32 0.0, %v1157
  %v1159 = vpop.f32.mrb[0].mxu0
  %1160 = vmatprep.mubr.f32.mxu0 0.0
  %1161 = vmatmul.mubr.f32.gmra.mrb[0].mxu0 %v237
  %v1162 = vpop.f32.mrb[0].mxu0
  %v1163 = vadd.f32 0.0, %v1162
  %v1164 = vpop.f32.mrb[0].mxu0
  %1165 = vmatprep.mubr.f32.mxu0 0.0
  %1166 = vmatmul.mubr.f32.gmra.mrb[0].mxu0 %v240
  %v1167 = vpop.f32.mrb[0].mxu0
  %v1168 = vadd.f32 0.0, %v1167
  %v1169 = vpop.f32.mrb[0].mxu0
  %1170 = vmatprep.mubr.f32.mxu0 0.0
  %1171 = vmatmul.mubr.f32.gmra.mrb[0].mxu0 %v243
  %v1172 = vpop.f32.mrb[0].mxu0
  %v1173 = vadd.f32 0.0, %v1172
  %v1174 = vpop.f32.mrb[0].mxu0
  %1175 = vmatprep.mubr.f32.mxu0 0.0
  %1176 = vmatmul.mubr.f32.gmra.mrb[0].mxu0 %v246
  %v1177 = vpop.f32.mrb[0].mxu0
  %v1178 = vadd.f32 0.0, %v1177
  %v1179 = vpop.f32.mrb[0].mxu0
  %1180 = vmatprep.mubr.f32.mxu0 0.0
  %1181 = vmatmul.mubr.f32.gmra.mrb[0].mxu0 %v249
  %v1182 = vpop.f32.mrb[0].mxu0
  %v1183 = vadd.f32 0.0, %v1182
  %v1184 = vpop.f32.mrb[0].mxu0
  %1185 = vmatprep.mubr.f32.mxu0 0.0
  %1186 = vmatmul.mubr.f32.gmra.mrb[0].mxu0 %v252
  %v1187 = vpop.f32.mrb[0].mxu0
  %v1188 = vadd.f32 0.0, %v1187
  %v1189 = vpop.f32.mrb[0].mxu0
  %1190 = vdwg.mxu0
  %1199 = vrot.lane.b32.xlu0 %v1153, 8
  %v1200 = vpop.permute.xlu0 %1199
  %1201 = vrot.lane.b32.xlu0 %v1158, 8
  %v1202 = vpop.permute.xlu0 %1201
  %1203 = vrot.lane.b32.xlu0 %v1163, 8
  %v1204 = vpop.permute.xlu0 %1203
  %1205 = vrot.lane.b32.xlu0 %v1168, 8
  %v1206 = vpop.permute.xlu0 %1205
  %1207 = vrot.lane.b32.xlu0 %v1173, 8
  %v1208 = vpop.permute.xlu0 %1207
  %1209 = vrot.lane.b32.xlu0 %v1178, 8
  %v1210 = vpop.permute.xlu0 %1209
  %1211 = vrot.lane.b32.xlu0 %v1183, 8
  %v1212 = vpop.permute.xlu0 %1211
  %1213 = vrot.lane.b32.xlu0 %v1188, 8
  %v1214 = vpop.permute.xlu0 %1213
  %v1223 = vadd.f32 %v1078, %v1200
  %v1224 = vadd.f32 %v1079, %v1202
  %v1225 = vadd.f32 %v1080, %v1204
  %v1226 = vadd.f32 %v1081, %v1206
  %v1227 = vadd.f32 %v1082, %v1208
  %v1228 = vadd.f32 %v1083, %v1210
  %v1229 = vadd.f32 %v1084, %v1212
  %v1230 = vadd.f32 %v1085, %v1214
  %v1231 = vxor.u32 %v1223, 2147483648
  %v1232 = vxor.u32 %v1224, 2147483648
  %v1233 = vxor.u32 %v1225, 2147483648
  %v1234 = vxor.u32 %v1226, 2147483648
  %v1235 = vxor.u32 %v1227, 2147483648
  %v1236 = vxor.u32 %v1228, 2147483648
  %v1237 = vmul.f32 %v1231, 1.442695
  %v1238 = vpow.pop %v1237
  %v1239 = vmul.f32 %v1232, 1.442695
  %v1240 = vpow.pop %v1239
  %v1241 = vmul.f32 %v1233, 1.442695
  %v1242 = vpow.pop %v1241
  %v1243 = vmul.f32 %v1234, 1.442695
  %v1244 = vpow.pop %v1243
  %v1245 = vmul.f32 %v1235, 1.442695
  %v1246 = vpow.pop %v1245
  %v1247 = vmul.f32 %v1236, 1.442695
  %v1248 = vpow.pop %v1247
  %v1249 = vadd.f32 %v1238, 1.0
  %v1250 = vadd.f32 %v1240, 1.0
  %v1251 = vadd.f32 %v1242, 1.0
  %v1252 = vadd.f32 %v1244, 1.0
  %v1253 = vadd.f32 %v1246, 1.0
  %v1254 = vadd.f32 %v1248, 1.0
  %v1255 = vrcp.pop %v1249
  %v1256 = vmul.f32 1.0, %v1255
  %v1257 = vrcp.pop %v1250
  %v1258 = vmul.f32 1.0, %v1257
  %v1259 = vrcp.pop %v1251
  %v1260 = vmul.f32 1.0, %v1259
  %v1261 = vrcp.pop %v1252
  %v1262 = vmul.f32 1.0, %v1261
  %v1263 = vrcp.pop %v1253
  %v1264 = vmul.f32 1.0, %v1263
  %v1265 = vrcp.pop %v1254
  %v1266 = vmul.f32 1.0, %v1265
  %v1267 = vtanh.pop %v1229
  %v1268 = vtanh.pop %v1230
  %1271 = vrot.lane.b32.xlu0 %v1061, 2
  %v1272 = vpop.permute.xlu0 %1271
  %1273 = vrot.lane.b32.xlu0 %v1062, 2
  %v1274 = vpop.permute.xlu0 %1273
  %v1277 = vmul.f32 %v1260, %v1272
  %v1278 = vmul.f32 %v1262, %v1274
  %v1279 = vmul.f32 %v1256, %v1267
  %v1280 = vmul.f32 %v1258, %v1268
  %v1281 = vadd.f32 %v1277, %v1279
  %v1282 = vadd.f32 %v1278, %v1280
  %v1283 = vtanh.pop %v1281
  %v1284 = vtanh.pop %v1282
  %v1285 = vmul.f32 %v1264, %v1283
  %v1286 = vmul.f32 %v1266, %v1284
  %1289 = vrot.lane.b32.xlu0 %v1285, 120
  %v1290 = vpop.permute.xlu0 %1289
  %1291 = vrot.lane.b32.xlu0 %v1286, 120
  %v1292 = vpop.permute.xlu0 %1291
  %s1295 = scalar_lea.vmem %s4, 64
  %1296 = vst.msk [vmem:[%s1295] sm:$0xff] %vm415, %v1290
  %1297 = vst.msk [vmem:[%s1295 + $0x8] sm:$0xff] %vm415, %v1292
  %v1298 = vld [vmem:[#allocation2] sm:$0xff]
  %v1299 = vld [vmem:[#allocation2 + $0x8] sm:$0xff]
  %v1300 = vld [vmem:[#allocation2 + $0x10] sm:$0xff]
  %v1301 = vld [vmem:[#allocation2 + $0x18] sm:$0xff]
  %v1302 = vld [vmem:[#allocation2 + $0x20] sm:$0xff]
  %v1303 = vld [vmem:[#allocation2 + $0x28] sm:$0xff]
  %v1304 = vld [vmem:[#allocation2 + $0x30] sm:$0xff]
  %v1305 = vld [vmem:[#allocation2 + $0x38] sm:$0xff]
  %1306 = vmatprep.subr.mxu0 0.0
  %1307 = vmatpush1.msra.mxu0 %v1290
  %1308 = vmatprep.subr.mxu0 0.0
  %1309 = vmatpush1.msra.mxu0 %v1292
  %1310 = vmatprep.subr.mxu0 0.0
  %1311 = vmatpush1.msra.mxu0 0.0
  %1312 = vmatprep.subr.mxu0 0.0
  %1313 = vmatpush1.msra.mxu0 0.0
  %1314 = vmatprep.subr.mxu0 0.0
  %1315 = vmatpush1.msra.mxu0 0.0
  %1316 = vmatprep.subr.mxu0 0.0
  %1317 = vmatpush1.msra.mxu0 0.0
  %1318 = vmatprep.subr.mxu0 0.0
  %1319 = vmatpush1.msra.mxu0 0.0
  %1320 = vmatprep.subr.mxu0 0.0
  %1321 = vmatpush1.msra.mxu0 0.0
  %1322 = vmatprep.subr.mxu0 0.0
  %1323 = vmatpush1.msra.mxu0 0.0
  %1324 = vmatprep.subr.mxu0 0.0
  %1325 = vmatpush1.msra.mxu0 0.0
  %1326 = vmatprep.subr.mxu0 0.0
  %1327 = vmatpush1.msra.mxu0 0.0
  %1328 = vmatprep.subr.mxu0 0.0
  %1329 = vmatpush1.msra.mxu0 0.0
  %1330 = vmatprep.subr.mxu0 0.0
  %1331 = vmatpush1.msra.mxu0 0.0
  %1332 = vmatprep.subr.mxu0 0.0
  %1333 = vmatpush1.msra.mxu0 0.0
  %1334 = vmatprep.subr.mxu0 0.0
  %1335 = vmatpush1.msra.mxu0 0.0
  %1336 = vmatprep.subr.mxu0 0.0
  %1337 = vmatpush1.msra.mxu0 0.0
  %1338 = vmatprep.subr.mxu0 0.0
  %1339 = vmatpush1.msra.mxu0 0.0
  %1340 = vmatprep.subr.mxu0 0.0
  %1341 = vmatpush1.msra.mxu0 0.0
  %1342 = vmatprep.subr.mxu0 0.0
  %1343 = vmatpush1.msra.mxu0 0.0
  %1344 = vmatprep.subr.mxu0 0.0
  %1345 = vmatpush1.msra.mxu0 0.0
  %1346 = vmatprep.subr.mxu0 0.0
  %1347 = vmatpush1.msra.mxu0 0.0
  %1348 = vmatprep.subr.mxu0 0.0
  %1349 = vmatpush1.msra.mxu0 0.0
  %1350 = vmatprep.subr.mxu0 0.0
  %1351 = vmatpush1.msra.mxu0 0.0
  %1352 = vmatprep.subr.mxu0 0.0
  %1353 = vmatpush1.msra.mxu0 0.0
  %1354 = vmatprep.subr.mxu0 0.0
  %1355 = vmatpush1.msra.mxu0 0.0
  %1356 = vmatprep.subr.mxu0 0.0
  %1357 = vmatpush1.msra.mxu0 0.0
  %1358 = vmatprep.subr.mxu0 0.0
  %1359 = vmatpush1.msra.mxu0 0.0
  %1360 = vmatprep.subr.mxu0 0.0
  %1361 = vmatpush1.msra.mxu0 0.0
  %1362 = vmatprep.subr.mxu0 0.0
  %1363 = vmatpush1.msra.mxu0 0.0
  %1364 = vmatprep.subr.mxu0 0.0
  %1365 = vmatpush1.msra.mxu0 0.0
  %1366 = vmatprep.subr.mxu0 0.0
  %1367 = vmatpush1.msra.mxu0 0.0
  %1368 = vmatprep.subr.mxu0 0.0
  %1369 = vmatpush1.msra.mxu0 0.0
  %1370 = vmatprep.mubr.f32.mxu0 0.0
  %1371 = vmatmul.mubr.f32.gmra.mrb[0].mxu0 %v231
  %v1372 = vpop.f32.mrb[0].mxu0
  %v1373 = vadd.f32 0.0, %v1372
  %v1374 = vpop.f32.mrb[0].mxu0
  %1375 = vmatprep.mubr.f32.mxu0 0.0
  %1376 = vmatmul.mubr.f32.gmra.mrb[0].mxu0 %v234
  %v1377 = vpop.f32.mrb[0].mxu0
  %v1378 = vadd.f32 0.0, %v1377
  %v1379 = vpop.f32.mrb[0].mxu0
  %1380 = vmatprep.mubr.f32.mxu0 0.0
  %1381 = vmatmul.mubr.f32.gmra.mrb[0].mxu0 %v237
  %v1382 = vpop.f32.mrb[0].mxu0
  %v1383 = vadd.f32 0.0, %v1382
  %v1384 = vpop.f32.mrb[0].mxu0
  %1385 = vmatprep.mubr.f32.mxu0 0.0
  %1386 = vmatmul.mubr.f32.gmra.mrb[0].mxu0 %v240
  %v1387 = vpop.f32.mrb[0].mxu0
  %v1388 = vadd.f32 0.0, %v1387
  %v1389 = vpop.f32.mrb[0].mxu0
  %1390 = vmatprep.mubr.f32.mxu0 0.0
  %1391 = vmatmul.mubr.f32.gmra.mrb[0].mxu0 %v243
  %v1392 = vpop.f32.mrb[0].mxu0
  %v1393 = vadd.f32 0.0, %v1392
  %v1394 = vpop.f32.mrb[0].mxu0
  %1395 = vmatprep.mubr.f32.mxu0 0.0
  %1396 = vmatmul.mubr.f32.gmra.mrb[0].mxu0 %v246
  %v1397 = vpop.f32.mrb[0].mxu0
  %v1398 = vadd.f32 0.0, %v1397
  %v1399 = vpop.f32.mrb[0].mxu0
  %1400 = vmatprep.mubr.f32.mxu0 0.0
  %1401 = vmatmul.mubr.f32.gmra.mrb[0].mxu0 %v249
  %v1402 = vpop.f32.mrb[0].mxu0
  %v1403 = vadd.f32 0.0, %v1402
  %v1404 = vpop.f32.mrb[0].mxu0
  %1405 = vmatprep.mubr.f32.mxu0 0.0
  %1406 = vmatmul.mubr.f32.gmra.mrb[0].mxu0 %v252
  %v1407 = vpop.f32.mrb[0].mxu0
  %v1408 = vadd.f32 0.0, %v1407
  %v1409 = vpop.f32.mrb[0].mxu0
  %1410 = vdwg.mxu0
  %1419 = vrot.lane.b32.xlu0 %v1373, 10
  %v1420 = vpop.permute.xlu0 %1419
  %1421 = vrot.lane.b32.xlu0 %v1378, 10
  %v1422 = vpop.permute.xlu0 %1421
  %1423 = vrot.lane.b32.xlu0 %v1383, 10
  %v1424 = vpop.permute.xlu0 %1423
  %1425 = vrot.lane.b32.xlu0 %v1388, 10
  %v1426 = vpop.permute.xlu0 %1425
  %1427 = vrot.lane.b32.xlu0 %v1393, 10
  %v1428 = vpop.permute.xlu0 %1427
  %1429 = vrot.lane.b32.xlu0 %v1398, 10
  %v1430 = vpop.permute.xlu0 %1429
  %1431 = vrot.lane.b32.xlu0 %v1403, 10
  %v1432 = vpop.permute.xlu0 %1431
  %1433 = vrot.lane.b32.xlu0 %v1408, 10
  %v1434 = vpop.permute.xlu0 %1433
  %v1443 = vadd.f32 %v1298, %v1420
  %v1444 = vadd.f32 %v1299, %v1422
  %v1445 = vadd.f32 %v1300, %v1424
  %v1446 = vadd.f32 %v1301, %v1426
  %v1447 = vadd.f32 %v1302, %v1428
  %v1448 = vadd.f32 %v1303, %v1430
  %v1449 = vadd.f32 %v1304, %v1432
  %v1450 = vadd.f32 %v1305, %v1434
  %v1451 = vxor.u32 %v1443, 2147483648
  %v1452 = vxor.u32 %v1444, 2147483648
  %v1453 = vxor.u32 %v1445, 2147483648
  %v1454 = vxor.u32 %v1446, 2147483648
  %v1455 = vxor.u32 %v1447, 2147483648
  %v1456 = vxor.u32 %v1448, 2147483648
  %v1457 = vmul.f32 %v1451, 1.442695
  %v1458 = vpow.pop %v1457
  %v1459 = vmul.f32 %v1452, 1.442695
  %v1460 = vpow.pop %v1459
  %v1461 = vmul.f32 %v1453, 1.442695
  %v1462 = vpow.pop %v1461
  %v1463 = vmul.f32 %v1454, 1.442695
  %v1464 = vpow.pop %v1463
  %v1465 = vmul.f32 %v1455, 1.442695
  %v1466 = vpow.pop %v1465
  %v1467 = vmul.f32 %v1456, 1.442695
  %v1468 = vpow.pop %v1467
  %v1469 = vadd.f32 %v1458, 1.0
  %v1470 = vadd.f32 %v1460, 1.0
  %v1471 = vadd.f32 %v1462, 1.0
  %v1472 = vadd.f32 %v1464, 1.0
  %v1473 = vadd.f32 %v1466, 1.0
  %v1474 = vadd.f32 %v1468, 1.0
  %v1475 = vrcp.pop %v1469
  %v1476 = vmul.f32 1.0, %v1475
  %v1477 = vrcp.pop %v1470
  %v1478 = vmul.f32 1.0, %v1477
  %v1479 = vrcp.pop %v1471
  %v1480 = vmul.f32 1.0, %v1479
  %v1481 = vrcp.pop %v1472
  %v1482 = vmul.f32 1.0, %v1481
  %v1483 = vrcp.pop %v1473
  %v1484 = vmul.f32 1.0, %v1483
  %v1485 = vrcp.pop %v1474
  %v1486 = vmul.f32 1.0, %v1485
  %v1487 = vtanh.pop %v1449
  %v1488 = vtanh.pop %v1450
  %1491 = vrot.lane.b32.xlu0 %v1281, 2
  %v1492 = vpop.permute.xlu0 %1491
  %1493 = vrot.lane.b32.xlu0 %v1282, 2
  %v1494 = vpop.permute.xlu0 %1493
  %v1497 = vmul.f32 %v1480, %v1492
  %v1498 = vmul.f32 %v1482, %v1494
  %v1499 = vmul.f32 %v1476, %v1487
  %v1500 = vmul.f32 %v1478, %v1488
  %v1501 = vadd.f32 %v1497, %v1499
  %v1502 = vadd.f32 %v1498, %v1500
  %v1503 = vtanh.pop %v1501
  %v1504 = vtanh.pop %v1502
  %v1505 = vmul.f32 %v1484, %v1503
  %v1506 = vmul.f32 %v1486, %v1504
  %1509 = vrot.lane.b32.xlu0 %v1505, 118
  %v1510 = vpop.permute.xlu0 %1509
  %1511 = vrot.lane.b32.xlu0 %v1506, 118
  %v1512 = vpop.permute.xlu0 %1511
  %s1515 = scalar_lea.vmem %s4, 80
  %1516 = vst.msk [vmem:[%s1515] sm:$0xff] %vm415, %v1510
  %1517 = vst.msk [vmem:[%s1515 + $0x8] sm:$0xff] %vm415, %v1512
  %v1518 = vld [vmem:[#allocation2] sm:$0xff]
  %v1519 = vld [vmem:[#allocation2 + $0x8] sm:$0xff]
  %v1520 = vld [vmem:[#allocation2 + $0x10] sm:$0xff]
  %v1521 = vld [vmem:[#allocation2 + $0x18] sm:$0xff]
  %v1522 = vld [vmem:[#allocation2 + $0x20] sm:$0xff]
  %v1523 = vld [vmem:[#allocation2 + $0x28] sm:$0xff]
  %v1524 = vld [vmem:[#allocation2 + $0x30] sm:$0xff]
  %v1525 = vld [vmem:[#allocation2 + $0x38] sm:$0xff]
  %1526 = vmatprep.subr.mxu0 0.0
  %1527 = vmatpush1.msra.mxu0 %v1510
  %1528 = vmatprep.subr.mxu0 0.0
  %1529 = vmatpush1.msra.mxu0 %v1512
  %1530 = vmatprep.subr.mxu0 0.0
  %1531 = vmatpush1.msra.mxu0 0.0
  %1532 = vmatprep.subr.mxu0 0.0
  %1533 = vmatpush1.msra.mxu0 0.0
  %1534 = vmatprep.subr.mxu0 0.0
  %1535 = vmatpush1.msra.mxu0 0.0
  %1536 = vmatprep.subr.mxu0 0.0
  %1537 = vmatpush1.msra.mxu0 0.0
  %1538 = vmatprep.subr.mxu0 0.0
  %1539 = vmatpush1.msra.mxu0 0.0
  %1540 = vmatprep.subr.mxu0 0.0
  %1541 = vmatpush1.msra.mxu0 0.0
  %1542 = vmatprep.subr.mxu0 0.0
  %1543 = vmatpush1.msra.mxu0 0.0
  %1544 = vmatprep.subr.mxu0 0.0
  %1545 = vmatpush1.msra.mxu0 0.0
  %1546 = vmatprep.subr.mxu0 0.0
  %1547 = vmatpush1.msra.mxu0 0.0
  %1548 = vmatprep.subr.mxu0 0.0
  %1549 = vmatpush1.msra.mxu0 0.0
  %1550 = vmatprep.subr.mxu0 0.0
  %1551 = vmatpush1.msra.mxu0 0.0
  %1552 = vmatprep.subr.mxu0 0.0
  %1553 = vmatpush1.msra.mxu0 0.0
  %1554 = vmatprep.subr.mxu0 0.0
  %1555 = vmatpush1.msra.mxu0 0.0
  %1556 = vmatprep.subr.mxu0 0.0
  %1557 = vmatpush1.msra.mxu0 0.0
  %1558 = vmatprep.subr.mxu0 0.0
  %1559 = vmatpush1.msra.mxu0 0.0
  %1560 = vmatprep.subr.mxu0 0.0
  %1561 = vmatpush1.msra.mxu0 0.0
  %1562 = vmatprep.subr.mxu0 0.0
  %1563 = vmatpush1.msra.mxu0 0.0
  %1564 = vmatprep.subr.mxu0 0.0
  %1565 = vmatpush1.msra.mxu0 0.0
  %1566 = vmatprep.subr.mxu0 0.0
  %1567 = vmatpush1.msra.mxu0 0.0
  %1568 = vmatprep.subr.mxu0 0.0
  %1569 = vmatpush1.msra.mxu0 0.0
  %1570 = vmatprep.subr.mxu0 0.0
  %1571 = vmatpush1.msra.mxu0 0.0
  %1572 = vmatprep.subr.mxu0 0.0
  %1573 = vmatpush1.msra.mxu0 0.0
  %1574 = vmatprep.subr.mxu0 0.0
  %1575 = vmatpush1.msra.mxu0 0.0
  %1576 = vmatprep.subr.mxu0 0.0
  %1577 = vmatpush1.msra.mxu0 0.0
  %1578 = vmatprep.subr.mxu0 0.0
  %1579 = vmatpush1.msra.mxu0 0.0
  %1580 = vmatprep.subr.mxu0 0.0
  %1581 = vmatpush1.msra.mxu0 0.0
  %1582 = vmatprep.subr.mxu0 0.0
  %1583 = vmatpush1.msra.mxu0 0.0
  %1584 = vmatprep.subr.mxu0 0.0
  %1585 = vmatpush1.msra.mxu0 0.0
  %1586 = vmatprep.subr.mxu0 0.0
  %1587 = vmatpush1.msra.mxu0 0.0
  %1588 = vmatprep.subr.mxu0 0.0
  %1589 = vmatpush1.msra.mxu0 0.0
  %1590 = vmatprep.mubr.f32.mxu0 0.0
  %1591 = vmatmul.mubr.f32.gmra.mrb[0].mxu0 %v231
  %v1592 = vpop.f32.mrb[0].mxu0
  %v1593 = vadd.f32 0.0, %v1592
  %v1594 = vpop.f32.mrb[0].mxu0
  %1595 = vmatprep.mubr.f32.mxu0 0.0
  %1596 = vmatmul.mubr.f32.gmra.mrb[0].mxu0 %v234
  %v1597 = vpop.f32.mrb[0].mxu0
  %v1598 = vadd.f32 0.0, %v1597
  %v1599 = vpop.f32.mrb[0].mxu0
  %1600 = vmatprep.mubr.f32.mxu0 0.0
  %1601 = vmatmul.mubr.f32.gmra.mrb[0].mxu0 %v237
  %v1602 = vpop.f32.mrb[0].mxu0
  %v1603 = vadd.f32 0.0, %v1602
  %v1604 = vpop.f32.mrb[0].mxu0
  %1605 = vmatprep.mubr.f32.mxu0 0.0
  %1606 = vmatmul.mubr.f32.gmra.mrb[0].mxu0 %v240
  %v1607 = vpop.f32.mrb[0].mxu0
  %v1608 = vadd.f32 0.0, %v1607
  %v1609 = vpop.f32.mrb[0].mxu0
  %1610 = vmatprep.mubr.f32.mxu0 0.0
  %1611 = vmatmul.mubr.f32.gmra.mrb[0].mxu0 %v243
  %v1612 = vpop.f32.mrb[0].mxu0
  %v1613 = vadd.f32 0.0, %v1612
  %v1614 = vpop.f32.mrb[0].mxu0
  %1615 = vmatprep.mubr.f32.mxu0 0.0
  %1616 = vmatmul.mubr.f32.gmra.mrb[0].mxu0 %v246
  %v1617 = vpop.f32.mrb[0].mxu0
  %v1618 = vadd.f32 0.0, %v1617
  %v1619 = vpop.f32.mrb[0].mxu0
  %1620 = vmatprep.mubr.f32.mxu0 0.0
  %1621 = vmatmul.mubr.f32.gmra.mrb[0].mxu0 %v249
  %v1622 = vpop.f32.mrb[0].mxu0
  %v1623 = vadd.f32 0.0, %v1622
  %v1624 = vpop.f32.mrb[0].mxu0
  %1625 = vmatprep.mubr.f32.mxu0 0.0
  %1626 = vmatmul.mubr.f32.gmra.mrb[0].mxu0 %v252
  %v1627 = vpop.f32.mrb[0].mxu0
  %v1628 = vadd.f32 0.0, %v1627
  %v1629 = vpop.f32.mrb[0].mxu0
  %1630 = vdwg.mxu0
  %1639 = vrot.lane.b32.xlu0 %v1593, 12
  %v1640 = vpop.permute.xlu0 %1639
  %1641 = vrot.lane.b32.xlu0 %v1598, 12
  %v1642 = vpop.permute.xlu0 %1641
  %1643 = vrot.lane.b32.xlu0 %v1603, 12
  %v1644 = vpop.permute.xlu0 %1643
  %1645 = vrot.lane.b32.xlu0 %v1608, 12
  %v1646 = vpop.permute.xlu0 %1645
  %1647 = vrot.lane.b32.xlu0 %v1613, 12
  %v1648 = vpop.permute.xlu0 %1647
  %1649 = vrot.lane.b32.xlu0 %v1618, 12
  %v1650 = vpop.permute.xlu0 %1649
  %1651 = vrot.lane.b32.xlu0 %v1623, 12
  %v1652 = vpop.permute.xlu0 %1651
  %1653 = vrot.lane.b32.xlu0 %v1628, 12
  %v1654 = vpop.permute.xlu0 %1653
  %v1663 = vadd.f32 %v1518, %v1640
  %v1664 = vadd.f32 %v1519, %v1642
  %v1665 = vadd.f32 %v1520, %v1644
  %v1666 = vadd.f32 %v1521, %v1646
  %v1667 = vadd.f32 %v1522, %v1648
  %v1668 = vadd.f32 %v1523, %v1650
  %v1669 = vadd.f32 %v1524, %v1652
  %v1670 = vadd.f32 %v1525, %v1654
  %v1671 = vxor.u32 %v1663, 2147483648
  %v1672 = vxor.u32 %v1664, 2147483648
  %v1673 = vxor.u32 %v1665, 2147483648
  %v1674 = vxor.u32 %v1666, 2147483648
  %v1675 = vxor.u32 %v1667, 2147483648
  %v1676 = vxor.u32 %v1668, 2147483648
  %v1677 = vmul.f32 %v1671, 1.442695
  %v1678 = vpow.pop %v1677
  %v1679 = vmul.f32 %v1672, 1.442695
  %v1680 = vpow.pop %v1679
  %v1681 = vmul.f32 %v1673, 1.442695
  %v1682 = vpow.pop %v1681
  %v1683 = vmul.f32 %v1674, 1.442695
  %v1684 = vpow.pop %v1683
  %v1685 = vmul.f32 %v1675, 1.442695
  %v1686 = vpow.pop %v1685
  %v1687 = vmul.f32 %v1676, 1.442695
  %v1688 = vpow.pop %v1687
  %v1689 = vadd.f32 %v1678, 1.0
  %v1690 = vadd.f32 %v1680, 1.0
  %v1691 = vadd.f32 %v1682, 1.0
  %v1692 = vadd.f32 %v1684, 1.0
  %v1693 = vadd.f32 %v1686, 1.0
  %v1694 = vadd.f32 %v1688, 1.0
  %v1695 = vrcp.pop %v1689
  %v1696 = vmul.f32 1.0, %v1695
  %v1697 = vrcp.pop %v1690
  %v1698 = vmul.f32 1.0, %v1697
  %v1699 = vrcp.pop %v1691
  %v1700 = vmul.f32 1.0, %v1699
  %v1701 = vrcp.pop %v1692
  %v1702 = vmul.f32 1.0, %v1701
  %v1703 = vrcp.pop %v1693
  %v1704 = vmul.f32 1.0, %v1703
  %v1705 = vrcp.pop %v1694
  %v1706 = vmul.f32 1.0, %v1705
  %v1707 = vtanh.pop %v1669
  %v1708 = vtanh.pop %v1670
  %1711 = vrot.lane.b32.xlu0 %v1501, 2
  %v1712 = vpop.permute.xlu0 %1711
  %1713 = vrot.lane.b32.xlu0 %v1502, 2
  %v1714 = vpop.permute.xlu0 %1713
  %v1717 = vmul.f32 %v1700, %v1712
  %v1718 = vmul.f32 %v1702, %v1714
  %v1719 = vmul.f32 %v1696, %v1707
  %v1720 = vmul.f32 %v1698, %v1708
  %v1721 = vadd.f32 %v1717, %v1719
  %v1722 = vadd.f32 %v1718, %v1720
  %v1723 = vtanh.pop %v1721
  %v1724 = vtanh.pop %v1722
  %v1725 = vmul.f32 %v1704, %v1723
  %v1726 = vmul.f32 %v1706, %v1724
  %1729 = vrot.lane.b32.xlu0 %v1725, 116
  %v1730 = vpop.permute.xlu0 %1729
  %1731 = vrot.lane.b32.xlu0 %v1726, 116
  %v1732 = vpop.permute.xlu0 %1731
  %s1735 = scalar_lea.vmem %s4, 96
  %1736 = vst.msk [vmem:[%s1735] sm:$0xff] %vm415, %v1730
  %1737 = vst.msk [vmem:[%s1735 + $0x8] sm:$0xff] %vm415, %v1732
  %v1738 = vld [vmem:[#allocation2] sm:$0xff]
  %v1739 = vld [vmem:[#allocation2 + $0x8] sm:$0xff]
  %v1740 = vld [vmem:[#allocation2 + $0x10] sm:$0xff]
  %v1741 = vld [vmem:[#allocation2 + $0x18] sm:$0xff]
  %v1742 = vld [vmem:[#allocation2 + $0x20] sm:$0xff]
  %v1743 = vld [vmem:[#allocation2 + $0x28] sm:$0xff]
  %v1744 = vld [vmem:[#allocation2 + $0x30] sm:$0xff]
  %v1745 = vld [vmem:[#allocation2 + $0x38] sm:$0xff]
  %1746 = vmatprep.subr.mxu0 0.0
  %1747 = vmatpush1.msra.mxu0 %v1730
  %1748 = vmatprep.subr.mxu0 0.0
  %1749 = vmatpush1.msra.mxu0 %v1732
  %1750 = vmatprep.subr.mxu0 0.0
  %1751 = vmatpush1.msra.mxu0 0.0
  %1752 = vmatprep.subr.mxu0 0.0
  %1753 = vmatpush1.msra.mxu0 0.0
  %1754 = vmatprep.subr.mxu0 0.0
  %1755 = vmatpush1.msra.mxu0 0.0
  %1756 = vmatprep.subr.mxu0 0.0
  %1757 = vmatpush1.msra.mxu0 0.0
  %1758 = vmatprep.subr.mxu0 0.0
  %1759 = vmatpush1.msra.mxu0 0.0
  %1760 = vmatprep.subr.mxu0 0.0
  %1761 = vmatpush1.msra.mxu0 0.0
  %1762 = vmatprep.subr.mxu0 0.0
  %1763 = vmatpush1.msra.mxu0 0.0
  %1764 = vmatprep.subr.mxu0 0.0
  %1765 = vmatpush1.msra.mxu0 0.0
  %1766 = vmatprep.subr.mxu0 0.0
  %1767 = vmatpush1.msra.mxu0 0.0
  %1768 = vmatprep.subr.mxu0 0.0
  %1769 = vmatpush1.msra.mxu0 0.0
  %1770 = vmatprep.subr.mxu0 0.0
  %1771 = vmatpush1.msra.mxu0 0.0
  %1772 = vmatprep.subr.mxu0 0.0
  %1773 = vmatpush1.msra.mxu0 0.0
  %1774 = vmatprep.subr.mxu0 0.0
  %1775 = vmatpush1.msra.mxu0 0.0
  %1776 = vmatprep.subr.mxu0 0.0
  %1777 = vmatpush1.msra.mxu0 0.0
  %1778 = vmatprep.subr.mxu0 0.0
  %1779 = vmatpush1.msra.mxu0 0.0
  %1780 = vmatprep.subr.mxu0 0.0
  %1781 = vmatpush1.msra.mxu0 0.0
  %1782 = vmatprep.subr.mxu0 0.0
  %1783 = vmatpush1.msra.mxu0 0.0
  %1784 = vmatprep.subr.mxu0 0.0
  %1785 = vmatpush1.msra.mxu0 0.0
  %1786 = vmatprep.subr.mxu0 0.0
  %1787 = vmatpush1.msra.mxu0 0.0
  %1788 = vmatprep.subr.mxu0 0.0
  %1789 = vmatpush1.msra.mxu0 0.0
  %1790 = vmatprep.subr.mxu0 0.0
  %1791 = vmatpush1.msra.mxu0 0.0
  %1792 = vmatprep.subr.mxu0 0.0
  %1793 = vmatpush1.msra.mxu0 0.0
  %1794 = vmatprep.subr.mxu0 0.0
  %1795 = vmatpush1.msra.mxu0 0.0
  %1796 = vmatprep.subr.mxu0 0.0
  %1797 = vmatpush1.msra.mxu0 0.0
  %1798 = vmatprep.subr.mxu0 0.0
  %1799 = vmatpush1.msra.mxu0 0.0
  %1800 = vmatprep.subr.mxu0 0.0
  %1801 = vmatpush1.msra.mxu0 0.0
  %1802 = vmatprep.subr.mxu0 0.0
  %1803 = vmatpush1.msra.mxu0 0.0
  %1804 = vmatprep.subr.mxu0 0.0
  %1805 = vmatpush1.msra.mxu0 0.0
  %1806 = vmatprep.subr.mxu0 0.0
  %1807 = vmatpush1.msra.mxu0 0.0
  %1808 = vmatprep.subr.mxu0 0.0
  %1809 = vmatpush1.msra.mxu0 0.0
  %1810 = vmatprep.mubr.f32.mxu0 0.0
  %1811 = vmatmul.mubr.f32.gmra.mrb[0].mxu0 %v231
  %v1812 = vpop.f32.mrb[0].mxu0
  %v1813 = vadd.f32 0.0, %v1812
  %v1814 = vpop.f32.mrb[0].mxu0
  %1815 = vmatprep.mubr.f32.mxu0 0.0
  %1816 = vmatmul.mubr.f32.gmra.mrb[0].mxu0 %v234
  %v1817 = vpop.f32.mrb[0].mxu0
  %v1818 = vadd.f32 0.0, %v1817
  %v1819 = vpop.f32.mrb[0].mxu0
  %1820 = vmatprep.mubr.f32.mxu0 0.0
  %1821 = vmatmul.mubr.f32.gmra.mrb[0].mxu0 %v237
  %v1822 = vpop.f32.mrb[0].mxu0
  %v1823 = vadd.f32 0.0, %v1822
  %v1824 = vpop.f32.mrb[0].mxu0
  %1825 = vmatprep.mubr.f32.mxu0 0.0
  %1826 = vmatmul.mubr.f32.gmra.mrb[0].mxu0 %v240
  %v1827 = vpop.f32.mrb[0].mxu0
  %v1828 = vadd.f32 0.0, %v1827
  %v1829 = vpop.f32.mrb[0].mxu0
  %1830 = vmatprep.mubr.f32.mxu0 0.0
  %1831 = vmatmul.mubr.f32.gmra.mrb[0].mxu0 %v243
  %v1832 = vpop.f32.mrb[0].mxu0
  %v1833 = vadd.f32 0.0, %v1832
  %v1834 = vpop.f32.mrb[0].mxu0
  %1835 = vmatprep.mubr.f32.mxu0 0.0
  %1836 = vmatmul.mubr.f32.gmra.mrb[0].mxu0 %v246
  %v1837 = vpop.f32.mrb[0].mxu0
  %v1838 = vadd.f32 0.0, %v1837
  %v1839 = vpop.f32.mrb[0].mxu0
  %1840 = vmatprep.mubr.f32.mxu0 0.0
  %1841 = vmatmul.mubr.f32.gmra.mrb[0].mxu0 %v249
  %v1842 = vpop.f32.mrb[0].mxu0
  %v1843 = vadd.f32 0.0, %v1842
  %v1844 = vpop.f32.mrb[0].mxu0
  %1845 = vmatprep.mubr.f32.mxu0 0.0
  %1846 = vmatmul.mubr.f32.gmra.mrb[0].mxu0 %v252
  %v1847 = vpop.f32.mrb[0].mxu0
  %v1848 = vadd.f32 0.0, %v1847
  %v1849 = vpop.f32.mrb[0].mxu0
  %1850 = vdwg.mxu0
  %1859 = vrot.lane.b32.xlu0 %v1813, 14
  %v1860 = vpop.permute.xlu0 %1859
  %1861 = vrot.lane.b32.xlu0 %v1818, 14
  %v1862 = vpop.permute.xlu0 %1861
  %1863 = vrot.lane.b32.xlu0 %v1823, 14
  %v1864 = vpop.permute.xlu0 %1863
  %1865 = vrot.lane.b32.xlu0 %v1828, 14
  %v1866 = vpop.permute.xlu0 %1865
  %1867 = vrot.lane.b32.xlu0 %v1833, 14
  %v1868 = vpop.permute.xlu0 %1867
  %1869 = vrot.lane.b32.xlu0 %v1838, 14
  %v1870 = vpop.permute.xlu0 %1869
  %1871 = vrot.lane.b32.xlu0 %v1843, 14
  %v1872 = vpop.permute.xlu0 %1871
  %1873 = vrot.lane.b32.xlu0 %v1848, 14
  %v1874 = vpop.permute.xlu0 %1873
  %v1883 = vadd.f32 %v1738, %v1860
  %v1884 = vadd.f32 %v1739, %v1862
  %v1885 = vadd.f32 %v1740, %v1864
  %v1886 = vadd.f32 %v1741, %v1866
  %v1887 = vadd.f32 %v1742, %v1868
  %v1888 = vadd.f32 %v1743, %v1870
  %v1889 = vadd.f32 %v1744, %v1872
  %v1890 = vadd.f32 %v1745, %v1874
  %v1891 = vxor.u32 %v1883, 2147483648
  %v1892 = vxor.u32 %v1884, 2147483648
  %v1893 = vxor.u32 %v1885, 2147483648
  %v1894 = vxor.u32 %v1886, 2147483648
  %v1895 = vxor.u32 %v1887, 2147483648
  %v1896 = vxor.u32 %v1888, 2147483648
  %v1897 = vmul.f32 %v1891, 1.442695
  %v1898 = vpow.pop %v1897
  %v1899 = vmul.f32 %v1892, 1.442695
  %v1900 = vpow.pop %v1899
  %v1901 = vmul.f32 %v1893, 1.442695
  %v1902 = vpow.pop %v1901
  %v1903 = vmul.f32 %v1894, 1.442695
  %v1904 = vpow.pop %v1903
  %v1905 = vmul.f32 %v1895, 1.442695
  %v1906 = vpow.pop %v1905
  %v1907 = vmul.f32 %v1896, 1.442695
  %v1908 = vpow.pop %v1907
  %v1909 = vadd.f32 %v1898, 1.0
  %v1910 = vadd.f32 %v1900, 1.0
  %v1911 = vadd.f32 %v1902, 1.0
  %v1912 = vadd.f32 %v1904, 1.0
  %v1913 = vadd.f32 %v1906, 1.0
  %v1914 = vadd.f32 %v1908, 1.0
  %v1915 = vrcp.pop %v1909
  %v1916 = vmul.f32 1.0, %v1915
  %v1917 = vrcp.pop %v1910
  %v1918 = vmul.f32 1.0, %v1917
  %v1919 = vrcp.pop %v1911
  %v1920 = vmul.f32 1.0, %v1919
  %v1921 = vrcp.pop %v1912
  %v1922 = vmul.f32 1.0, %v1921
  %v1923 = vrcp.pop %v1913
  %v1924 = vmul.f32 1.0, %v1923
  %v1925 = vrcp.pop %v1914
  %v1926 = vmul.f32 1.0, %v1925
  %v1927 = vtanh.pop %v1889
  %v1928 = vtanh.pop %v1890
  %1931 = vrot.lane.b32.xlu0 %v1721, 2
  %v1932 = vpop.permute.xlu0 %1931
  %1933 = vrot.lane.b32.xlu0 %v1722, 2
  %v1934 = vpop.permute.xlu0 %1933
  %v1937 = vmul.f32 %v1920, %v1932
  %v1938 = vmul.f32 %v1922, %v1934
  %v1939 = vmul.f32 %v1916, %v1927
  %v1940 = vmul.f32 %v1918, %v1928
  %v1941 = vadd.f32 %v1937, %v1939
  %v1942 = vadd.f32 %v1938, %v1940
  %v1943 = vtanh.pop %v1941
  %v1944 = vtanh.pop %v1942
  %v1945 = vmul.f32 %v1924, %v1943
  %v1946 = vmul.f32 %v1926, %v1944
  %1949 = vrot.lane.b32.xlu0 %v1945, 114
  %v1950 = vpop.permute.xlu0 %1949
  %1951 = vrot.lane.b32.xlu0 %v1946, 114
  %v1952 = vpop.permute.xlu0 %1951
  %s1955 = scalar_lea.vmem %s4, 112
  %1956 = vst.msk [vmem:[%s1955] sm:$0xff] %vm415, %v1950
  %1957 = vst.msk [vmem:[%s1955 + $0x8] sm:$0xff] %vm415, %v1952
  %v1958 = vld [vmem:[#allocation2] sm:$0xff]
  %v1959 = vld [vmem:[#allocation2 + $0x8] sm:$0xff]
  %v1960 = vld [vmem:[#allocation2 + $0x10] sm:$0xff]
  %v1961 = vld [vmem:[#allocation2 + $0x18] sm:$0xff]
  %v1962 = vld [vmem:[#allocation2 + $0x20] sm:$0xff]
  %v1963 = vld [vmem:[#allocation2 + $0x28] sm:$0xff]
  %v1964 = vld [vmem:[#allocation2 + $0x30] sm:$0xff]
  %v1965 = vld [vmem:[#allocation2 + $0x38] sm:$0xff]
  %1966 = vmatprep.subr.mxu0 0.0
  %1967 = vmatpush1.msra.mxu0 %v1950
  %1968 = vmatprep.subr.mxu0 0.0
  %1969 = vmatpush1.msra.mxu0 %v1952
  %1970 = vmatprep.subr.mxu0 0.0
  %1971 = vmatpush1.msra.mxu0 0.0
  %1972 = vmatprep.subr.mxu0 0.0
  %1973 = vmatpush1.msra.mxu0 0.0
  %1974 = vmatprep.subr.mxu0 0.0
  %1975 = vmatpush1.msra.mxu0 0.0
  %1976 = vmatprep.subr.mxu0 0.0
  %1977 = vmatpush1.msra.mxu0 0.0
  %1978 = vmatprep.subr.mxu0 0.0
  %1979 = vmatpush1.msra.mxu0 0.0
  %1980 = vmatprep.subr.mxu0 0.0
  %1981 = vmatpush1.msra.mxu0 0.0
  %1982 = vmatprep.subr.mxu0 0.0
  %1983 = vmatpush1.msra.mxu0 0.0
  %1984 = vmatprep.subr.mxu0 0.0
  %1985 = vmatpush1.msra.mxu0 0.0
  %1986 = vmatprep.subr.mxu0 0.0
  %1987 = vmatpush1.msra.mxu0 0.0
  %1988 = vmatprep.subr.mxu0 0.0
  %1989 = vmatpush1.msra.mxu0 0.0
  %1990 = vmatprep.subr.mxu0 0.0
  %1991 = vmatpush1.msra.mxu0 0.0
  %1992 = vmatprep.subr.mxu0 0.0
  %1993 = vmatpush1.msra.mxu0 0.0
  %1994 = vmatprep.subr.mxu0 0.0
  %1995 = vmatpush1.msra.mxu0 0.0
  %1996 = vmatprep.subr.mxu0 0.0
  %1997 = vmatpush1.msra.mxu0 0.0
  %1998 = vmatprep.subr.mxu0 0.0
  %1999 = vmatpush1.msra.mxu0 0.0
  %2000 = vmatprep.subr.mxu0 0.0
  %2001 = vmatpush1.msra.mxu0 0.0
  %2002 = vmatprep.subr.mxu0 0.0
  %2003 = vmatpush1.msra.mxu0 0.0
  %2004 = vmatprep.subr.mxu0 0.0
  %2005 = vmatpush1.msra.mxu0 0.0
  %2006 = vmatprep.subr.mxu0 0.0
  %2007 = vmatpush1.msra.mxu0 0.0
  %2008 = vmatprep.subr.mxu0 0.0
  %2009 = vmatpush1.msra.mxu0 0.0
  %2010 = vmatprep.subr.mxu0 0.0
  %2011 = vmatpush1.msra.mxu0 0.0
  %2012 = vmatprep.subr.mxu0 0.0
  %2013 = vmatpush1.msra.mxu0 0.0
  %2014 = vmatprep.subr.mxu0 0.0
  %2015 = vmatpush1.msra.mxu0 0.0
  %2016 = vmatprep.subr.mxu0 0.0
  %2017 = vmatpush1.msra.mxu0 0.0
  %2018 = vmatprep.subr.mxu0 0.0
  %2019 = vmatpush1.msra.mxu0 0.0
  %2020 = vmatprep.subr.mxu0 0.0
  %2021 = vmatpush1.msra.mxu0 0.0
  %2022 = vmatprep.subr.mxu0 0.0
  %2023 = vmatpush1.msra.mxu0 0.0
  %2024 = vmatprep.subr.mxu0 0.0
  %2025 = vmatpush1.msra.mxu0 0.0
  %2026 = vmatprep.subr.mxu0 0.0
  %2027 = vmatpush1.msra.mxu0 0.0
  %2028 = vmatprep.subr.mxu0 0.0
  %2029 = vmatpush1.msra.mxu0 0.0
  %2030 = vmatprep.mubr.f32.mxu0 0.0
  %2031 = vmatmul.mubr.f32.gmra.mrb[0].mxu0 %v231
  %v2032 = vpop.f32.mrb[0].mxu0
  %v2033 = vadd.f32 0.0, %v2032
  %v2034 = vpop.f32.mrb[0].mxu0
  %2035 = vmatprep.mubr.f32.mxu0 0.0
  %2036 = vmatmul.mubr.f32.gmra.mrb[0].mxu0 %v234
  %v2037 = vpop.f32.mrb[0].mxu0
  %v2038 = vadd.f32 0.0, %v2037
  %v2039 = vpop.f32.mrb[0].mxu0
  %2040 = vmatprep.mubr.f32.mxu0 0.0
  %2041 = vmatmul.mubr.f32.gmra.mrb[0].mxu0 %v237
  %v2042 = vpop.f32.mrb[0].mxu0
  %v2043 = vadd.f32 0.0, %v2042
  %v2044 = vpop.f32.mrb[0].mxu0
  %2045 = vmatprep.mubr.f32.mxu0 0.0
  %2046 = vmatmul.mubr.f32.gmra.mrb[0].mxu0 %v240
  %v2047 = vpop.f32.mrb[0].mxu0
  %v2048 = vadd.f32 0.0, %v2047
  %v2049 = vpop.f32.mrb[0].mxu0
  %2050 = vmatprep.mubr.f32.mxu0 0.0
  %2051 = vmatmul.mubr.f32.gmra.mrb[0].mxu0 %v243
  %v2052 = vpop.f32.mrb[0].mxu0
  %v2053 = vadd.f32 0.0, %v2052
  %v2054 = vpop.f32.mrb[0].mxu0
  %2055 = vmatprep.mubr.f32.mxu0 0.0
  %2056 = vmatmul.mubr.f32.gmra.mrb[0].mxu0 %v246
  %v2057 = vpop.f32.mrb[0].mxu0
  %v2058 = vadd.f32 0.0, %v2057
  %v2059 = vpop.f32.mrb[0].mxu0
  %2060 = vmatprep.mubr.f32.mxu0 0.0
  %2061 = vmatmul.mubr.f32.gmra.mrb[0].mxu0 %v249
  %v2062 = vpop.f32.mrb[0].mxu0
  %v2063 = vadd.f32 0.0, %v2062
  %v2064 = vpop.f32.mrb[0].mxu0
  %2065 = vmatprep.mubr.f32.mxu0 0.0
  %2066 = vmatmul.mubr.f32.gmra.mrb[0].mxu0 %v252
  %v2067 = vpop.f32.mrb[0].mxu0
  %v2068 = vadd.f32 0.0, %v2067
  %v2069 = vpop.f32.mrb[0].mxu0
  %2070 = vdwg.mxu0
  %2079 = vrot.lane.b32.xlu0 %v2033, 16
  %v2080 = vpop.permute.xlu0 %2079
  %2081 = vrot.lane.b32.xlu0 %v2038, 16
  %v2082 = vpop.permute.xlu0 %2081
  %2083 = vrot.lane.b32.xlu0 %v2043, 16
  %v2084 = vpop.permute.xlu0 %2083
  %2085 = vrot.lane.b32.xlu0 %v2048, 16
  %v2086 = vpop.permute.xlu0 %2085
  %2087 = vrot.lane.b32.xlu0 %v2053, 16
  %v2088 = vpop.permute.xlu0 %2087
  %2089 = vrot.lane.b32.xlu0 %v2058, 16
  %v2090 = vpop.permute.xlu0 %2089
  %2091 = vrot.lane.b32.xlu0 %v2063, 16
  %v2092 = vpop.permute.xlu0 %2091
  %2093 = vrot.lane.b32.xlu0 %v2068, 16
  %v2094 = vpop.permute.xlu0 %2093
  %v2103 = vadd.f32 %v1958, %v2080
  %v2104 = vadd.f32 %v1959, %v2082
  %v2105 = vadd.f32 %v1960, %v2084
  %v2106 = vadd.f32 %v1961, %v2086
  %v2107 = vadd.f32 %v1962, %v2088
  %v2108 = vadd.f32 %v1963, %v2090
  %v2109 = vadd.f32 %v1964, %v2092
  %v2110 = vadd.f32 %v1965, %v2094
  %v2111 = vxor.u32 %v2103, 2147483648
  %v2112 = vxor.u32 %v2104, 2147483648
  %v2113 = vxor.u32 %v2105, 2147483648
  %v2114 = vxor.u32 %v2106, 2147483648
  %v2115 = vxor.u32 %v2107, 2147483648
  %v2116 = vxor.u32 %v2108, 2147483648
  %v2117 = vmul.f32 %v2111, 1.442695
  %v2118 = vpow.pop %v2117
  %v2119 = vmul.f32 %v2112, 1.442695
  %v2120 = vpow.pop %v2119
  %v2121 = vmul.f32 %v2113, 1.442695
  %v2122 = vpow.pop %v2121
  %v2123 = vmul.f32 %v2114, 1.442695
  %v2124 = vpow.pop %v2123
  %v2125 = vmul.f32 %v2115, 1.442695
  %v2126 = vpow.pop %v2125
  %v2127 = vmul.f32 %v2116, 1.442695
  %v2128 = vpow.pop %v2127
  %v2129 = vadd.f32 %v2118, 1.0
  %v2130 = vadd.f32 %v2120, 1.0
  %v2131 = vadd.f32 %v2122, 1.0
  %v2132 = vadd.f32 %v2124, 1.0
  %v2133 = vadd.f32 %v2126, 1.0
  %v2134 = vadd.f32 %v2128, 1.0
  %v2135 = vrcp.pop %v2129
  %v2136 = vmul.f32 1.0, %v2135
  %v2137 = vrcp.pop %v2130
  %v2138 = vmul.f32 1.0, %v2137
  %v2139 = vrcp.pop %v2131
  %v2140 = vmul.f32 1.0, %v2139
  %v2141 = vrcp.pop %v2132
  %v2142 = vmul.f32 1.0, %v2141
  %v2143 = vrcp.pop %v2133
  %v2144 = vmul.f32 1.0, %v2143
  %v2145 = vrcp.pop %v2134
  %v2146 = vmul.f32 1.0, %v2145
  %v2147 = vtanh.pop %v2109
  %v2148 = vtanh.pop %v2110
  %2151 = vrot.lane.b32.xlu0 %v1941, 2
  %v2152 = vpop.permute.xlu0 %2151
  %2153 = vrot.lane.b32.xlu0 %v1942, 2
  %v2154 = vpop.permute.xlu0 %2153
  %v2157 = vmul.f32 %v2140, %v2152
  %v2158 = vmul.f32 %v2142, %v2154
  %v2159 = vmul.f32 %v2136, %v2147
  %v2160 = vmul.f32 %v2138, %v2148
  %v2161 = vadd.f32 %v2157, %v2159
  %v2162 = vadd.f32 %v2158, %v2160
  %v2163 = vtanh.pop %v2161
  %v2164 = vtanh.pop %v2162
  %v2165 = vmul.f32 %v2144, %v2163
  %v2166 = vmul.f32 %v2146, %v2164
  %2169 = vrot.lane.b32.xlu0 %v2165, 112
  %v2170 = vpop.permute.xlu0 %2169
  %2171 = vrot.lane.b32.xlu0 %v2166, 112
  %v2172 = vpop.permute.xlu0 %2171
  %s2175 = scalar_lea.vmem %s4, 128
  %2176 = vst.msk [vmem:[%s2175] sm:$0xff] %vm415, %v2170
  %2177 = vst.msk [vmem:[%s2175 + $0x8] sm:$0xff] %vm415, %v2172
  %v2178 = vld [vmem:[#allocation2] sm:$0xff]
  %v2179 = vld [vmem:[#allocation2 + $0x8] sm:$0xff]
  %v2180 = vld [vmem:[#allocation2 + $0x10] sm:$0xff]
  %v2181 = vld [vmem:[#allocation2 + $0x18] sm:$0xff]
  %v2182 = vld [vmem:[#allocation2 + $0x20] sm:$0xff]
  %v2183 = vld [vmem:[#allocation2 + $0x28] sm:$0xff]
  %v2184 = vld [vmem:[#allocation2 + $0x30] sm:$0xff]
  %v2185 = vld [vmem:[#allocation2 + $0x38] sm:$0xff]
  %2186 = vmatprep.subr.mxu0 0.0
  %2187 = vmatpush1.msra.mxu0 %v2170
  %2188 = vmatprep.subr.mxu0 0.0
  %2189 = vmatpush1.msra.mxu0 %v2172
  %2190 = vmatprep.subr.mxu0 0.0
  %2191 = vmatpush1.msra.mxu0 0.0
  %2192 = vmatprep.subr.mxu0 0.0
  %2193 = vmatpush1.msra.mxu0 0.0
  %2194 = vmatprep.subr.mxu0 0.0
  %2195 = vmatpush1.msra.mxu0 0.0
  %2196 = vmatprep.subr.mxu0 0.0
  %2197 = vmatpush1.msra.mxu0 0.0
  %2198 = vmatprep.subr.mxu0 0.0
  %2199 = vmatpush1.msra.mxu0 0.0
  %2200 = vmatprep.subr.mxu0 0.0
  %2201 = vmatpush1.msra.mxu0 0.0
  %2202 = vmatprep.subr.mxu0 0.0
  %2203 = vmatpush1.msra.mxu0 0.0
  %2204 = vmatprep.subr.mxu0 0.0
  %2205 = vmatpush1.msra.mxu0 0.0
  %2206 = vmatprep.subr.mxu0 0.0
  %2207 = vmatpush1.msra.mxu0 0.0
  %2208 = vmatprep.subr.mxu0 0.0
  %2209 = vmatpush1.msra.mxu0 0.0
  %2210 = vmatprep.subr.mxu0 0.0
  %2211 = vmatpush1.msra.mxu0 0.0
  %2212 = vmatprep.subr.mxu0 0.0
  %2213 = vmatpush1.msra.mxu0 0.0
  %2214 = vmatprep.subr.mxu0 0.0
  %2215 = vmatpush1.msra.mxu0 0.0
  %2216 = vmatprep.subr.mxu0 0.0
  %2217 = vmatpush1.msra.mxu0 0.0
  %2218 = vmatprep.subr.mxu0 0.0
  %2219 = vmatpush1.msra.mxu0 0.0
  %2220 = vmatprep.subr.mxu0 0.0
  %2221 = vmatpush1.msra.mxu0 0.0
  %2222 = vmatprep.subr.mxu0 0.0
  %2223 = vmatpush1.msra.mxu0 0.0
  %2224 = vmatprep.subr.mxu0 0.0
  %2225 = vmatpush1.msra.mxu0 0.0
  %2226 = vmatprep.subr.mxu0 0.0
  %2227 = vmatpush1.msra.mxu0 0.0
  %2228 = vmatprep.subr.mxu0 0.0
  %2229 = vmatpush1.msra.mxu0 0.0
  %2230 = vmatprep.subr.mxu0 0.0
  %2231 = vmatpush1.msra.mxu0 0.0
  %2232 = vmatprep.subr.mxu0 0.0
  %2233 = vmatpush1.msra.mxu0 0.0
  %2234 = vmatprep.subr.mxu0 0.0
  %2235 = vmatpush1.msra.mxu0 0.0
  %2236 = vmatprep.subr.mxu0 0.0
  %2237 = vmatpush1.msra.mxu0 0.0
  %2238 = vmatprep.subr.mxu0 0.0
  %2239 = vmatpush1.msra.mxu0 0.0
  %2240 = vmatprep.subr.mxu0 0.0
  %2241 = vmatpush1.msra.mxu0 0.0
  %2242 = vmatprep.subr.mxu0 0.0
  %2243 = vmatpush1.msra.mxu0 0.0
  %2244 = vmatprep.subr.mxu0 0.0
  %2245 = vmatpush1.msra.mxu0 0.0
  %2246 = vmatprep.subr.mxu0 0.0
  %2247 = vmatpush1.msra.mxu0 0.0
  %2248 = vmatprep.subr.mxu0 0.0
  %2249 = vmatpush1.msra.mxu0 0.0
  %2250 = vmatprep.mubr.f32.mxu0 0.0
  %2251 = vmatmul.mubr.f32.gmra.mrb[0].mxu0 %v231
  %v2252 = vpop.f32.mrb[0].mxu0
  %v2253 = vadd.f32 0.0, %v2252
  %v2254 = vpop.f32.mrb[0].mxu0
  %2255 = vmatprep.mubr.f32.mxu0 0.0
  %2256 = vmatmul.mubr.f32.gmra.mrb[0].mxu0 %v234
  %v2257 = vpop.f32.mrb[0].mxu0
  %v2258 = vadd.f32 0.0, %v2257
  %v2259 = vpop.f32.mrb[0].mxu0
  %2260 = vmatprep.mubr.f32.mxu0 0.0
  %2261 = vmatmul.mubr.f32.gmra.mrb[0].mxu0 %v237
  %v2262 = vpop.f32.mrb[0].mxu0
  %v2263 = vadd.f32 0.0, %v2262
  %v2264 = vpop.f32.mrb[0].mxu0
  %2265 = vmatprep.mubr.f32.mxu0 0.0
  %2266 = vmatmul.mubr.f32.gmra.mrb[0].mxu0 %v240
  %v2267 = vpop.f32.mrb[0].mxu0
  %v2268 = vadd.f32 0.0, %v2267
  %v2269 = vpop.f32.mrb[0].mxu0
  %2270 = vmatprep.mubr.f32.mxu0 0.0
  %2271 = vmatmul.mubr.f32.gmra.mrb[0].mxu0 %v243
  %v2272 = vpop.f32.mrb[0].mxu0
  %v2273 = vadd.f32 0.0, %v2272
  %v2274 = vpop.f32.mrb[0].mxu0
  %2275 = vmatprep.mubr.f32.mxu0 0.0
  %2276 = vmatmul.mubr.f32.gmra.mrb[0].mxu0 %v246
  %v2277 = vpop.f32.mrb[0].mxu0
  %v2278 = vadd.f32 0.0, %v2277
  %v2279 = vpop.f32.mrb[0].mxu0
  %2280 = vmatprep.mubr.f32.mxu0 0.0
  %2281 = vmatmul.mubr.f32.gmra.mrb[0].mxu0 %v249
  %v2282 = vpop.f32.mrb[0].mxu0
  %v2283 = vadd.f32 0.0, %v2282
  %v2284 = vpop.f32.mrb[0].mxu0
  %2285 = vmatprep.mubr.f32.mxu0 0.0
  %2286 = vmatmul.mubr.f32.gmra.mrb[0].mxu0 %v252
  %v2287 = vpop.f32.mrb[0].mxu0
  %v2288 = vadd.f32 0.0, %v2287
  %v2289 = vpop.f32.mrb[0].mxu0
  %2290 = vdwg.mxu0
  %2299 = vrot.lane.b32.xlu0 %v2253, 18
  %v2300 = vpop.permute.xlu0 %2299
  %2301 = vrot.lane.b32.xlu0 %v2258, 18
  %v2302 = vpop.permute.xlu0 %2301
  %2303 = vrot.lane.b32.xlu0 %v2263, 18
  %v2304 = vpop.permute.xlu0 %2303
  %2305 = vrot.lane.b32.xlu0 %v2268, 18
  %v2306 = vpop.permute.xlu0 %2305
  %2307 = vrot.lane.b32.xlu0 %v2273, 18
  %v2308 = vpop.permute.xlu0 %2307
  %2309 = vrot.lane.b32.xlu0 %v2278, 18
  %v2310 = vpop.permute.xlu0 %2309
  %2311 = vrot.lane.b32.xlu0 %v2283, 18
  %v2312 = vpop.permute.xlu0 %2311
  %2313 = vrot.lane.b32.xlu0 %v2288, 18
  %v2314 = vpop.permute.xlu0 %2313
  %v2323 = vadd.f32 %v2178, %v2300
  %v2324 = vadd.f32 %v2179, %v2302
  %v2325 = vadd.f32 %v2180, %v2304
  %v2326 = vadd.f32 %v2181, %v2306
  %v2327 = vadd.f32 %v2182, %v2308
  %v2328 = vadd.f32 %v2183, %v2310
  %v2329 = vadd.f32 %v2184, %v2312
  %v2330 = vadd.f32 %v2185, %v2314
  %v2331 = vxor.u32 %v2323, 2147483648
  %v2332 = vxor.u32 %v2324, 2147483648
  %v2333 = vxor.u32 %v2325, 2147483648
  %v2334 = vxor.u32 %v2326, 2147483648
  %v2335 = vxor.u32 %v2327, 2147483648
  %v2336 = vxor.u32 %v2328, 2147483648
  %v2337 = vmul.f32 %v2331, 1.442695
  %v2338 = vpow.pop %v2337
  %v2339 = vmul.f32 %v2332, 1.442695
  %v2340 = vpow.pop %v2339
  %v2341 = vmul.f32 %v2333, 1.442695
  %v2342 = vpow.pop %v2341
  %v2343 = vmul.f32 %v2334, 1.442695
  %v2344 = vpow.pop %v2343
  %v2345 = vmul.f32 %v2335, 1.442695
  %v2346 = vpow.pop %v2345
  %v2347 = vmul.f32 %v2336, 1.442695
  %v2348 = vpow.pop %v2347
  %v2349 = vadd.f32 %v2338, 1.0
  %v2350 = vadd.f32 %v2340, 1.0
  %v2351 = vadd.f32 %v2342, 1.0
  %v2352 = vadd.f32 %v2344, 1.0
  %v2353 = vadd.f32 %v2346, 1.0
  %v2354 = vadd.f32 %v2348, 1.0
  %v2355 = vrcp.pop %v2349
  %v2356 = vmul.f32 1.0, %v2355
  %v2357 = vrcp.pop %v2350
  %v2358 = vmul.f32 1.0, %v2357
  %v2359 = vrcp.pop %v2351
  %v2360 = vmul.f32 1.0, %v2359
  %v2361 = vrcp.pop %v2352
  %v2362 = vmul.f32 1.0, %v2361
  %v2363 = vrcp.pop %v2353
  %v2364 = vmul.f32 1.0, %v2363
  %v2365 = vrcp.pop %v2354
  %v2366 = vmul.f32 1.0, %v2365
  %v2367 = vtanh.pop %v2329
  %v2368 = vtanh.pop %v2330
  %2371 = vrot.lane.b32.xlu0 %v2161, 2
  %v2372 = vpop.permute.xlu0 %2371
  %2373 = vrot.lane.b32.xlu0 %v2162, 2
  %v2374 = vpop.permute.xlu0 %2373
  %v2377 = vmul.f32 %v2360, %v2372
  %v2378 = vmul.f32 %v2362, %v2374
  %v2379 = vmul.f32 %v2356, %v2367
  %v2380 = vmul.f32 %v2358, %v2368
  %v2381 = vadd.f32 %v2377, %v2379
  %v2382 = vadd.f32 %v2378, %v2380
  %v2383 = vtanh.pop %v2381
  %v2384 = vtanh.pop %v2382
  %v2385 = vmul.f32 %v2364, %v2383
  %v2386 = vmul.f32 %v2366, %v2384
  %2389 = vrot.lane.b32.xlu0 %v2385, 110
  %v2390 = vpop.permute.xlu0 %2389
  %2391 = vrot.lane.b32.xlu0 %v2386, 110
  %v2392 = vpop.permute.xlu0 %2391
  %s2395 = scalar_lea.vmem %s4, 144
  %2396 = vst.msk [vmem:[%s2395] sm:$0xff] %vm415, %v2390
  %2397 = vst.msk [vmem:[%s2395 + $0x8] sm:$0xff] %vm415, %v2392
  // Predicated region
  $region18: #{input_attention_encoder.1} parent=0 // pred_check
    _
  $region19: #{input_attention_encoder.1} parent=0 // pred_check_branch
    %2399 = sbr.rel (0) target = $region21
  $region20: #{input_attention_encoder.1} parent=0 // pred_region
    _
  $region21: #{input_attention_encoder.1} parent=0 // pred_fallthru
    _
  // Predicated region
  $region22: #{input_attention_encoder.1} parent=0 // pred_check
    _
  $region23: #{input_attention_encoder.1} parent=0 // pred_check_branch
    %2401 = sbr.rel (0) target = $region25
  $region24: #{input_attention_encoder.1} parent=0 // pred_region
    _
  $region25: #{input_attention_encoder.1} parent=0 // pred_fallthru
    _

</llo_original>
